<compile_context>
chip_gen: v5e
topology: v5e:2x2
jax: 0.10.0
libtpu: 0.0.40
codegen_flags: <defaults>
</compile_context>

<pallas_src>
import functools

import jax
import jax.numpy as jnp
from jax import lax
from jax.experimental import pallas as pl
from jax.experimental.pallas import tpu as pltpu

HP = 128      # lane-padded hidden width
PAD_N = 128   # lane-dense classifier output width (real logits live in [:, :2])


# ----------------------------- Pallas kernel -------------------------------

def make_fused_kernel(num_layers, T, Bt):
    """Fused embedding + RNN stack (wavefront) + classifier for one batch tile."""
    L = num_layers

    def kernel(*refs):
        ids_ref = refs[0]                              # (1, T*Bt, 1) int32, time-major
        table_ref = refs[1]                            # (V_pad, D)
        layer_refs = refs[2:2 + 3 * L]                 # (w_ih, w_hh, b) per layer
        cls_w_ref = refs[2 + 3 * L]                    # (HP, PAD_N)
        cls_b_ref = refs[3 + 3 * L]                    # (1, PAD_N)
        out_ref = refs[4 + 3 * L]                      # (1, T*Bt, PAD_N)
        xw0_ref = refs[5 + 3 * L]                      # (T*Bt, HP) scratch
        hL_ref = refs[6 + 3 * L]                       # (T*Bt, HP) scratch

        V_pad = table_ref.shape[0]
        hp = xw0_ref.shape[-1]

        # ---- Fused embedding + hoisted layer-0 input projection ------------
        # onehot @ (table @ W_ih0) selects exactly emb[id] @ W_ih0 (one-hot
        # rows have a single 1.0), so this is numerically the gather+matmul.
        tw = jnp.dot(table_ref[...], layer_refs[0][...],
                     preferred_element_type=jnp.float32)            # (V_pad, HP)
        ids = ids_ref[0]                                            # (T*Bt, 1)
        iota = lax.broadcasted_iota(jnp.int32, (T * Bt, V_pad), 1)
        onehot = (ids == iota).astype(jnp.float32)                  # (T*Bt, V_pad)
        xw0_ref[...] = (jnp.dot(onehot, tw,
                                preferred_element_type=jnp.float32)
                        + layer_refs[2][...])                       # + b0

        # ---- Wavefront recurrence: every layer advances one step per iter --
        # Layer l at wavefront iteration i computes timestep t = i - l using
        # layer l-1's output from the previous iteration (same timestep).
        h_state = [jnp.zeros((Bt, hp), jnp.float32) for _ in range(L)]
        prev_out = [None] * L
        for i in range(T + L - 1):                     # fully unrolled (static)
            new_prev = list(prev_out)
            for l in range(L):
                t = i - l
                if 0 <= t < T:
                    w_ih_ref, w_hh_ref, b_ref = layer_refs[3 * l:3 * l + 3]
                    if l == 0:
                        inp = xw0_ref[pl.ds(t * Bt, Bt), :]         # hoisted proj
                    else:
                        inp = (jnp.dot(prev_out[l - 1], w_ih_ref[...],
                                       preferred_element_type=jnp.float32)
                               + b_ref[...])
                    h_new = jnp.tanh(
                        inp + jnp.dot(h_state[l], w_hh_ref[...],
                                      preferred_element_type=jnp.float32))
                    h_state[l] = h_new
                    new_prev[l] = h_new
                    if l == L - 1:                     # only final layer kept
                        hL_ref[pl.ds(t * Bt, Bt), :] = h_new
            prev_out = new_prev

        # ---- Lane-dense classifier over all timesteps at once --------------
        out_ref[0] = (jnp.dot(hL_ref[...], cls_w_ref[...],
                              preferred_element_type=jnp.float32)
                      + cls_b_ref[...])

    return kernel


# ------------------------------ Wrapper -------------------------------------

def prepare_padded_params(params):
    """One-time (outside jit) zero-padding of weights to lane-dense shapes."""
    H = params["rnn"][0]["w_hh_t"].shape[0]
    V, D = params["embedding"].shape
    V_pad = max(8, ((V + 7) // 8) * 8)

    table_pad = jnp.zeros((V_pad, D), jnp.float32).at[:V].set(params["embedding"])
    layers = []
    for li, layer in enumerate(params["rnn"]):
        din = layer["w_ih_t"].shape[0]
        din_pad = din if li == 0 else HP
        w_ih = jnp.zeros((din_pad, HP), jnp.float32).at[:din, :H].set(layer["w_ih_t"])
        w_hh = jnp.zeros((HP, HP), jnp.float32).at[:H, :H].set(layer["w_hh_t"])
        b = jnp.zeros((1, HP), jnp.float32).at[:, :H].set(layer["b"])
        layers.append((w_ih, w_hh, b))
    cls_w = jnp.zeros((HP, PAD_N), jnp.float32).at[:H, :2].set(params["cls_w_t"])
    cls_b = jnp.zeros((1, PAD_N), jnp.float32).at[:, :2].set(params["cls_b"])
    return {"table": table_pad, "layers": layers, "cls_w": cls_w, "cls_b": cls_b}


@functools.partial(jax.jit, static_argnames=("n_tiles",))
def torch_model_forward(pp, x_ids, n_tiles=1):
    """Equivalent of TorchModel.forward(x) (y=None branch)."""
    B, T = x_ids.shape
    assert B % n_tiles == 0
    Bt = B // n_tiles
    V_pad, D = pp["table"].shape
    L = len(pp["layers"])

    # Token ids, time-major inside each batch tile: flat index = t*Bt + b.
    ids = (x_ids.astype(jnp.int32)
           .reshape(n_tiles, Bt, T)
           .transpose(0, 2, 1)
           .reshape(n_tiles, T * Bt, 1))

    args = [ids, pp["table"]]
    in_specs = [pl.BlockSpec((1, T * Bt, 1), lambda i: (i, 0, 0)),
                pl.BlockSpec((V_pad, D), lambda i: (0, 0))]
    for (w_ih, w_hh, b) in pp["layers"]:
        args += [w_ih, w_hh, b]
        in_specs += [pl.BlockSpec(w_ih.shape, lambda i: (0, 0)),
                     pl.BlockSpec(w_hh.shape, lambda i: (0, 0)),
                     pl.BlockSpec(b.shape, lambda i: (0, 0))]
    args += [pp["cls_w"], pp["cls_b"]]
    in_specs += [pl.BlockSpec(pp["cls_w"].shape, lambda i: (0, 0)),
                 pl.BlockSpec(pp["cls_b"].shape, lambda i: (0, 0))]

    # Advisory cost estimate (includes weight bytes).
    flops = 2 * V_pad * D * HP                       # table @ W_ih0
    flops += 2 * B * T * V_pad * HP                  # one-hot select + layer-0 proj
    flops += 2 * B * T * HP * HP * (2 * L - 1)       # recurrent + deep-layer input proj
    flops += 2 * B * T * HP * PAD_N                  # classifier
    weight_bytes = 4 * (int(pp["table"].size)
                        + sum(int(w.size) + int(h.size) + int(bb.size)
                              for (w, h, bb) in pp["layers"])
                        + int(pp["cls_w"].size) + int(pp["cls_b"].size))
    cost = pl.CostEstimate(
        flops=int(flops),
        transcendentals=int(B * T * HP * L),
        bytes_accessed=int(4 * B * T + weight_bytes + 4 * B * T * PAD_N))

    out = pl.pallas_call(
        make_fused_kernel(L, T, Bt),
        grid=(n_tiles,),                              # 1 program per batch tile
        out_shape=jax.ShapeDtypeStruct((n_tiles, T * Bt, PAD_N), jnp.float32),
        in_specs=in_specs,
        out_specs=pl.BlockSpec((1, T * Bt, PAD_N), lambda i: (i, 0, 0)),
        scratch_shapes=[pltpu.VMEM((T * Bt, HP), jnp.float32),   # hoisted layer-0 proj
                        pltpu.VMEM((T * Bt, HP), jnp.float32)],  # final-layer sequence
        compiler_params=pltpu.CompilerParams(
            dimension_semantics=("parallel",)),       # tile axis -> both TCs on v7x
        cost_estimate=cost,
    )(*args)

    # (n_tiles, T*Bt, PAD_N) -> (B, T, 2)
    out = out.reshape(n_tiles, T, Bt, PAD_N)[..., :2]
    return jnp.transpose(out, (0, 2, 1, 3)).reshape(B, T, 2)


# ---------------------- Pure-JAX reference (for checking) ------------------

def reference_forward(params, x_ids):
    emb = jnp.take(params["embedding"], x_ids, axis=0)
    h = emb
    for layer in params["rnn"]:
        B, T, _ = h.shape
        Hh = layer["w_hh_t"].shape[0]
        hs = []
        ht = jnp.zeros((B, Hh), jnp.float32)
        for t in range(T):
            ht = jnp.tanh(h[:, t, :] @ layer["w_ih_t"] + ht @ layer["w_hh_t"]
                          + layer["b"])
            hs.append(ht)
        h = jnp.stack(hs, axis=1)
    B, T, Hh = h.shape
    return (h.reshape(B * T, Hh) @ params["cls_w_t"]
            + params["cls_b"]).reshape(B, T, 2)


# -------------------------------- Setup -------------------------------------

def init_params(key, vocab_len, input_dim, hidden_size, num_rnn_layers):
    """Deterministic params mimicking PyTorch default initialization shapes."""
    keys = jax.random.split(key, 3 + 4 * num_rnn_layers)
    ki = iter(keys)

    # nn.Embedding(len(vocab)+1, input_dim, padding_idx=0): N(0,1), row 0 zeroed.
    emb = jax.random.normal(next(ki), (vocab_len + 1, input_dim), jnp.float32)
    emb = emb.at[0].set(0.0)

    # nn.RNN: weight_ih_l{k} (H, Din), weight_hh_l{k} (H, H), biases (H,),
    # uniform(-1/sqrt(H), 1/sqrt(H)).
    k_rnn = 1.0 / jnp.sqrt(jnp.float32(hidden_size))
    rnn_layers = []
    for layer in range(num_rnn_layers):
        din = input_dim if layer == 0 else hidden_size
        w_ih = jax.random.uniform(next(ki), (hidden_size, din), jnp.float32,
                                  -k_rnn, k_rnn)
        w_hh = jax.random.uniform(next(ki), (hidden_size, hidden_size),
                                  jnp.float32, -k_rnn, k_rnn)
        b_ih = jax.random.uniform(next(ki), (hidden_size,), jnp.float32,
                                  -k_rnn, k_rnn)
        b_hh = jax.random.uniform(next(ki), (hidden_size,), jnp.float32,
                                  -k_rnn, k_rnn)
        rnn_layers.append({
            "w_ih_t": w_ih.T,                      # (Din, H)
            "w_hh_t": w_hh.T,                      # (H, H)
            "b": (b_ih + b_hh)[None, :],           # (1, H)
        })

    # nn.Linear(hidden_size, 2): uniform(-1/sqrt(H), 1/sqrt(H)).
    k_lin = 1.0 / jnp.sqrt(jnp.float32(hidden_size))
    cls_w = jax.random.uniform(next(ki), (2, hidden_size), jnp.float32,
                               -k_lin, k_lin)
    cls_b = jax.random.uniform(next(ki), (2,), jnp.float32, -k_lin, k_lin)

    return {
        "embedding": emb,
        "rnn": rnn_layers,
        "cls_w_t": cls_w.T,                        # (H, 2)
        "cls_b": cls_b[None, :],                   # (1, 2)
    }


if __name__ == "__main__":
    key = jax.random.PRNGKey(0)
    k_param, k_data = jax.random.split(key)

    vocab_len = 20        # len(vocab)
    input_dim = 32
    hidden_size = 32
    num_rnn_layers = 2
    B, T = 2, 8

    params = init_params(k_param, vocab_len, input_dim, hidden_size,
                         num_rnn_layers)
    padded = prepare_padded_params(params)        # one-time, outside the jit

    # Token ids in [0, vocab_len]; 0 is the padding index.
    x_ids = jax.random.randint(k_data, (B, T), 0, vocab_len + 1, jnp.int32)

    y_pred = jax.block_until_ready(torch_model_forward(padded, x_ids))
    y_ref = jax.block_until_ready(reference_forward(params, x_ids))

    assert y_pred.shape == (B, T, 2), y_pred.shape
    assert jnp.allclose(y_pred, y_ref, atol=1e-4, rtol=1e-4), "mismatch vs reference"

    # TODO(synk): training branch (CrossEntropyLoss with ignore_index=-100) not
    # implemented; only the inference (y=None) path is kernelized.
    print("KERNEL_OK")
</pallas_src>

<mosaic_0001>
module attributes {stable_mosaic.version = 11 : i64} {
  func.func @kernel(%arg0: i32, %arg1: memref<1x16x1xi32, #tpu.memory_space<vmem>>, %arg2: memref<24x32xf32, #tpu.memory_space<vmem>>, %arg3: memref<32x128xf32, #tpu.memory_space<vmem>>, %arg4: memref<128x128xf32, #tpu.memory_space<vmem>>, %arg5: memref<1x128xf32, #tpu.memory_space<vmem>>, %arg6: memref<128x128xf32, #tpu.memory_space<vmem>>, %arg7: memref<128x128xf32, #tpu.memory_space<vmem>>, %arg8: memref<1x128xf32, #tpu.memory_space<vmem>>, %arg9: memref<128x128xf32, #tpu.memory_space<vmem>>, %arg10: memref<1x128xf32, #tpu.memory_space<vmem>>, %arg11: memref<1x16x128xf32, #tpu.memory_space<vmem>>, %arg12: memref<16x128xf32, #tpu.memory_space<vmem>>, %arg13: memref<16x128xf32, #tpu.memory_space<vmem>>) attributes {dimension_semantics = [#tpu.dimension_semantics<parallel>], iteration_bounds = array<i64: 1>, scalar_prefetch = 0 : i64, scratch_operands = 2 : i64, tpu.core_type = #tpu.core_type<tc>, window_params = [{transform_indices = @transform_0, window_bounds = array<i64: 1, 16, 1>}, {pipeline_mode = #tpu.pipeline_mode<synchronous>, transform_indices = @transform_1, window_bounds = array<i64: 24, 32>}, {pipeline_mode = #tpu.pipeline_mode<synchronous>, transform_indices = @transform_2, window_bounds = array<i64: 32, 128>}, {pipeline_mode = #tpu.pipeline_mode<synchronous>, transform_indices = @transform_3, window_bounds = array<i64: 128, 128>}, {pipeline_mode = #tpu.pipeline_mode<synchronous>, transform_indices = @transform_4, window_bounds = array<i64: 1, 128>}, {pipeline_mode = #tpu.pipeline_mode<synchronous>, transform_indices = @transform_5, window_bounds = array<i64: 128, 128>}, {pipeline_mode = #tpu.pipeline_mode<synchronous>, transform_indices = @transform_6, window_bounds = array<i64: 128, 128>}, {pipeline_mode = #tpu.pipeline_mode<synchronous>, transform_indices = @transform_7, window_bounds = array<i64: 1, 128>}, {pipeline_mode = #tpu.pipeline_mode<synchronous>, transform_indices = @transform_8, window_bounds = array<i64: 128, 128>}, {pipeline_mode = #tpu.pipeline_mode<synchronous>, transform_indices = @transform_9, window_bounds = array<i64: 1, 128>}, {transform_indices = @transform_10, window_bounds = array<i64: 1, 16, 128>}]} {
    %c0 = arith.constant 0 : index
    %c0_0 = arith.constant 0 : index
    %0 = vector.load %arg2[%c0, %c0_0] : memref<24x32xf32, #tpu.memory_space<vmem>>, vector<24x32xf32>
    %c0_1 = arith.constant 0 : index
    %c0_2 = arith.constant 0 : index
    %1 = vector.load %arg3[%c0_1, %c0_2] : memref<32x128xf32, #tpu.memory_space<vmem>>, vector<32x128xf32>
    %cst = arith.constant dense<0.000000e+00> : vector<24x128xf32>
    %2 = tpu.matmul %0, %1, %cst {dimension_numbers = #tpu.dot_dimension_numbers<[1], [0], [0], [1], [0, 0, 1, 1], [], []>} : vector<24x32xf32>, vector<32x128xf32>, vector<24x128xf32> -> vector<24x128xf32>
    %c0_3 = arith.constant 0 : index
    %c0_4 = arith.constant 0 : index
    %c0_5 = arith.constant 0 : index
    %3 = vector.load %arg1[%c0_3, %c0_4, %c0_5] : memref<1x16x1xi32, #tpu.memory_space<vmem>>, vector<1x16x1xi32>
    %4 = vector.shape_cast %3 : vector<1x16x1xi32> to vector<16x1xi32>
    %5 = tpu.iota {dimensions = array<i32: 1>} : vector<16x24xi32>
    %6 = vector.broadcast %4 : vector<16x1xi32> to vector<16x24xi32>
    %7 = arith.cmpi eq, %6, %5 : vector<16x24xi32>
    %8 = arith.extui %7 : vector<16x24xi1> to vector<16x24xi32>
    %9 = arith.sitofp %8 : vector<16x24xi32> to vector<16x24xf32>
    %cst_6 = arith.constant dense<0.000000e+00> : vector<16x128xf32>
    %10 = tpu.matmul %9, %2, %cst_6 {dimension_numbers = #tpu.dot_dimension_numbers<[1], [0], [0], [1], [0, 0, 1, 1], [], []>} : vector<16x24xf32>, vector<24x128xf32>, vector<16x128xf32> -> vector<16x128xf32>
    %c0_7 = arith.constant 0 : index
    %c0_8 = arith.constant 0 : index
    %11 = vector.load %arg5[%c0_7, %c0_8] : memref<1x128xf32, #tpu.memory_space<vmem>>, vector<1x128xf32>
    %12 = vector.broadcast %11 : vector<1x128xf32> to vector<16x128xf32>
    %13 = arith.addf %10, %12 : vector<16x128xf32>
    %c0_9 = arith.constant 0 : index
    %c0_10 = arith.constant 0 : index
    %14 = vector.load %arg12[%c0_9, %c0_10] : memref<16x128xf32, #tpu.memory_space<vmem>>, vector<16x128xf32>
    tpu.vector_store %arg12[%c0_9, %c0_10], %13 {strides = array<i32>} : memref<16x128xf32, #tpu.memory_space<vmem>>, vector<16x128xf32>,
    %cst_11 = arith.constant 0.000000e+00 : f32
    %15 = vector.broadcast %cst_11 : f32 to vector<2x128xf32>
    %cst_12 = arith.constant 0.000000e+00 : f32
    %16 = vector.broadcast %cst_12 : f32 to vector<2x128xf32>
    %c0_13 = arith.constant 0 : index
    %c0_14 = arith.constant 0 : index
    %17 = vector.load %arg12[%c0_13, %c0_14] : memref<16x128xf32, #tpu.memory_space<vmem>>, vector<2x128xf32>
    %c0_15 = arith.constant 0 : index
    %c0_16 = arith.constant 0 : index
    %18 = vector.load %arg4[%c0_15, %c0_16] : memref<128x128xf32, #tpu.memory_space<vmem>>, vector<128x128xf32>
    %cst_17 = arith.constant dense<0.000000e+00> : vector<2x128xf32>
    %19 = tpu.matmul %15, %18, %cst_17 {dimension_numbers = #tpu.dot_dimension_numbers<[1], [0], [0], [1], [0, 0, 1, 1], [], []>} : vector<2x128xf32>, vector<128x128xf32>, vector<2x128xf32> -> vector<2x128xf32>
    %20 = arith.addf %17, %19 : vector<2x128xf32>
    %21 = math.tanh %20 : vector<2x128xf32>
    %c2 = arith.constant 2 : index
    %c0_18 = arith.constant 0 : index
    %22 = vector.load %arg12[%c2, %c0_18] : memref<16x128xf32, #tpu.memory_space<vmem>>, vector<2x128xf32>
    %c0_19 = arith.constant 0 : index
    %c0_20 = arith.constant 0 : index
    %23 = vector.load %arg4[%c0_19, %c0_20] : memref<128x128xf32, #tpu.memory_space<vmem>>, vector<128x128xf32>
    %cst_21 = arith.constant dense<0.000000e+00> : vector<2x128xf32>
    %24 = tpu.matmul %21, %23, %cst_21 {dimension_numbers = #tpu.dot_dimension_numbers<[1], [0], [0], [1], [0, 0, 1, 1], [], []>} : vector<2x128xf32>, vector<128x128xf32>, vector<2x128xf32> -> vector<2x128xf32>
    %25 = arith.addf %22, %24 : vector<2x128xf32>
    %26 = math.tanh %25 : vector<2x128xf32>
    %c0_22 = arith.constant 0 : index
    %c0_23 = arith.constant 0 : index
    %27 = vector.load %arg6[%c0_22, %c0_23] : memref<128x128xf32, #tpu.memory_space<vmem>>, vector<128x128xf32>
    %cst_24 = arith.constant dense<0.000000e+00> : vector<2x128xf32>
    %28 = tpu.matmul %21, %27, %cst_24 {dimension_numbers = #tpu.dot_dimension_numbers<[1], [0], [0], [1], [0, 0, 1, 1], [], []>} : vector<2x128xf32>, vector<128x128xf32>, vector<2x128xf32> -> vector<2x128xf32>
    %c0_25 = arith.constant 0 : index
    %c0_26 = arith.constant 0 : index
    %29 = vector.load %arg8[%c0_25, %c0_26] : memref<1x128xf32, #tpu.memory_space<vmem>>, vector<1x128xf32>
    %30 = vector.broadcast %29 : vector<1x128xf32> to vector<2x128xf32>
    %31 = arith.addf %28, %30 : vector<2x128xf32>
    %c0_27 = arith.constant 0 : index
    %c0_28 = arith.constant 0 : index
    %32 = vector.load %arg7[%c0_27, %c0_28] : memref<128x128xf32, #tpu.memory_space<vmem>>, vector<128x128xf32>
    %cst_29 = arith.constant dense<0.000000e+00> : vector<2x128xf32>
    %33 = tpu.matmul %16, %32, %cst_29 {dimension_numbers = #tpu.dot_dimension_numbers<[1], [0], [0], [1], [0, 0, 1, 1], [], []>} : vector<2x128xf32>, vector<128x128xf32>, vector<2x128xf32> -> vector<2x128xf32>
    %34 = arith.addf %31, %33 : vector<2x128xf32>
    %35 = math.tanh %34 : vector<2x128xf32>
    %c0_30 = arith.constant 0 : index
    %c0_31 = arith.constant 0 : index
    %36 = vector.load %arg13[%c0_30, %c0_31] : memref<16x128xf32, #tpu.memory_space<vmem>>, vector<2x128xf32>
    tpu.vector_store %arg13[%c0_30, %c0_31], %35 {strides = array<i32>} : memref<16x128xf32, #tpu.memory_space<vmem>>, vector<2x128xf32>,
    %c4 = arith.constant 4 : index
    %c0_32 = arith.constant 0 : index
    %37 = vector.load %arg12[%c4, %c0_32] : memref<16x128xf32, #tpu.memory_space<vmem>>, vector<2x128xf32>
    %c0_33 = arith.constant 0 : index
    %c0_34 = arith.constant 0 : index
    %38 = vector.load %arg4[%c0_33, %c0_34] : memref<128x128xf32, #tpu.memory_space<vmem>>, vector<128x128xf32>
    %cst_35 = arith.constant dense<0.000000e+00> : vector<2x128xf32>
    %39 = tpu.matmul %26, %38, %cst_35 {dimension_numbers = #tpu.dot_dimension_numbers<[1], [0], [0], [1], [0, 0, 1, 1], [], []>} : vector<2x128xf32>, vector<128x128xf32>, vector<2x128xf32> -> vector<2x128xf32>
    %40 = arith.addf %37, %39 : vector<2x128xf32>
    %41 = math.tanh %40 : vector<2x128xf32>
    %c0_36 = arith.constant 0 : index
    %c0_37 = arith.constant 0 : index
    %42 = vector.load %arg6[%c0_36, %c0_37] : memref<128x128xf32, #tpu.memory_space<vmem>>, vector<128x128xf32>
    %cst_38 = arith.constant dense<0.000000e+00> : vector<2x128xf32>
    %43 = tpu.matmul %26, %42, %cst_38 {dimension_numbers = #tpu.dot_dimension_numbers<[1], [0], [0], [1], [0, 0, 1, 1], [], []>} : vector<2x128xf32>, vector<128x128xf32>, vector<2x128xf32> -> vector<2x128xf32>
    %c0_39 = arith.constant 0 : index
    %c0_40 = arith.constant 0 : index
    %44 = vector.load %arg8[%c0_39, %c0_40] : memref<1x128xf32, #tpu.memory_space<vmem>>, vector<1x128xf32>
    %45 = vector.broadcast %44 : vector<1x128xf32> to vector<2x128xf32>
    %46 = arith.addf %43, %45 : vector<2x128xf32>
    %c0_41 = arith.constant 0 : index
    %c0_42 = arith.constant 0 : index
    %47 = vector.load %arg7[%c0_41, %c0_42] : memref<128x128xf32, #tpu.memory_space<vmem>>, vector<128x128xf32>
    %cst_43 = arith.constant dense<0.000000e+00> : vector<2x128xf32>
    %48 = tpu.matmul %35, %47, %cst_43 {dimension_numbers = #tpu.dot_dimension_numbers<[1], [0], [0], [1], [0, 0, 1, 1], [], []>} : vector<2x128xf32>, vector<128x128xf32>, vector<2x128xf32> -> vector<2x128xf32>
    %49 = arith.addf %46, %48 : vector<2x128xf32>
    %50 = math.tanh %49 : vector<2x128xf32>
    %c2_44 = arith.constant 2 : index
    %c0_45 = arith.constant 0 : index
    %51 = vector.load %arg13[%c2_44, %c0_45] : memref<16x128xf32, #tpu.memory_space<vmem>>, vector<2x128xf32>
    tpu.vector_store %arg13[%c2_44, %c0_45], %50 {strides = array<i32>} : memref<16x128xf32, #tpu.memory_space<vmem>>, vector<2x128xf32>,
    %c6 = arith.constant 6 : index
    %c0_46 = arith.constant 0 : index
    %52 = vector.load %arg12[%c6, %c0_46] : memref<16x128xf32, #tpu.memory_space<vmem>>, vector<2x128xf32>
    %c0_47 = arith.constant 0 : index
    %c0_48 = arith.constant 0 : index
    %53 = vector.load %arg4[%c0_47, %c0_48] : memref<128x128xf32, #tpu.memory_space<vmem>>, vector<128x128xf32>
    %cst_49 = arith.constant dense<0.000000e+00> : vector<2x128xf32>
    %54 = tpu.matmul %41, %53, %cst_49 {dimension_numbers = #tpu.dot_dimension_numbers<[1], [0], [0], [1], [0, 0, 1, 1], [], []>} : vector<2x128xf32>, vector<128x128xf32>, vector<2x128xf32> -> vector<2x128xf32>
    %55 = arith.addf %52, %54 : vector<2x128xf32>
    %56 = math.tanh %55 : vector<2x128xf32>
    %c0_50 = arith.constant 0 : index
    %c0_51 = arith.constant 0 : index
    %57 = vector.load %arg6[%c0_50, %c0_51] : memref<128x128xf32, #tpu.memory_space<vmem>>, vector<128x128xf32>
    %cst_52 = arith.constant dense<0.000000e+00> : vector<2x128xf32>
    %58 = tpu.matmul %41, %57, %cst_52 {dimension_numbers = #tpu.dot_dimension_numbers<[1], [0], [0], [1], [0, 0, 1, 1], [], []>} : vector<2x128xf32>, vector<128x128xf32>, vector<2x128xf32> -> vector<2x128xf32>
    %c0_53 = arith.constant 0 : index
    %c0_54 = arith.constant 0 : index
    %59 = vector.load %arg8[%c0_53, %c0_54] : memref<1x128xf32, #tpu.memory_space<vmem>>, vector<1x128xf32>
    %60 = vector.broadcast %59 : vector<1x128xf32> to vector<2x128xf32>
    %61 = arith.addf %58, %60 : vector<2x128xf32>
    %c0_55 = arith.constant 0 : index
    %c0_56 = arith.constant 0 : index
    %62 = vector.load %arg7[%c0_55, %c0_56] : memref<128x128xf32, #tpu.memory_space<vmem>>, vector<128x128xf32>
    %cst_57 = arith.constant dense<0.000000e+00> : vector<2x128xf32>
    %63 = tpu.matmul %50, %62, %cst_57 {dimension_numbers = #tpu.dot_dimension_numbers<[1], [0], [0], [1], [0, 0, 1, 1], [], []>} : vector<2x128xf32>, vector<128x128xf32>, vector<2x128xf32> -> vector<2x128xf32>
    %64 = arith.addf %61, %63 : vector<2x128xf32>
    %65 = math.tanh %64 : vector<2x128xf32>
    %c4_58 = arith.constant 4 : index
    %c0_59 = arith.constant 0 : index
    %66 = vector.load %arg13[%c4_58, %c0_59] : memref<16x128xf32, #tpu.memory_space<vmem>>, vector<2x128xf32>
    tpu.vector_store %arg13[%c4_58, %c0_59], %65 {strides = array<i32>} : memref<16x128xf32, #tpu.memory_space<vmem>>, vector<2x128xf32>,
    %c8 = arith.constant 8 : index
    %c0_60 = arith.constant 0 : index
    %67 = vector.load %arg12[%c8, %c0_60] : memref<16x128xf32, #tpu.memory_space<vmem>>, vector<2x128xf32>
    %c0_61 = arith.constant 0 : index
    %c0_62 = arith.constant 0 : index
    %68 = vector.load %arg4[%c0_61, %c0_62] : memref<128x128xf32, #tpu.memory_space<vmem>>, vector<128x128xf32>
    %cst_63 = arith.constant dense<0.000000e+00> : vector<2x128xf32>
    %69 = tpu.matmul %56, %68, %cst_63 {dimension_numbers = #tpu.dot_dimension_numbers<[1], [0], [0], [1], [0, 0, 1, 1], [], []>} : vector<2x128xf32>, vector<128x128xf32>, vector<2x128xf32> -> vector<2x128xf32>
    %70 = arith.addf %67, %69 : vector<2x128xf32>
    %71 = math.tanh %70 : vector<2x128xf32>
    %c0_64 = arith.constant 0 : index
    %c0_65 = arith.constant 0 : index
    %72 = vector.load %arg6[%c0_64, %c0_65] : memref<128x128xf32, #tpu.memory_space<vmem>>, vector<128x128xf32>
    %cst_66 = arith.constant dense<0.000000e+00> : vector<2x128xf32>
    %73 = tpu.matmul %56, %72, %cst_66 {dimension_numbers = #tpu.dot_dimension_numbers<[1], [0], [0], [1], [0, 0, 1, 1], [], []>} : vector<2x128xf32>, vector<128x128xf32>, vector<2x128xf32> -> vector<2x128xf32>
    %c0_67 = arith.constant 0 : index
    %c0_68 = arith.constant 0 : index
    %74 = vector.load %arg8[%c0_67, %c0_68] : memref<1x128xf32, #tpu.memory_space<vmem>>, vector<1x128xf32>
    %75 = vector.broadcast %74 : vector<1x128xf32> to vector<2x128xf32>
    %76 = arith.addf %73, %75 : vector<2x128xf32>
    %c0_69 = arith.constant 0 : index
    %c0_70 = arith.constant 0 : index
    %77 = vector.load %arg7[%c0_69, %c0_70] : memref<128x128xf32, #tpu.memory_space<vmem>>, vector<128x128xf32>
    %cst_71 = arith.constant dense<0.000000e+00> : vector<2x128xf32>
    %78 = tpu.matmul %65, %77, %cst_71 {dimension_numbers = #tpu.dot_dimension_numbers<[1], [0], [0], [1], [0, 0, 1, 1], [], []>} : vector<2x128xf32>, vector<128x128xf32>, vector<2x128xf32> -> vector<2x128xf32>
    %79 = arith.addf %76, %78 : vector<2x128xf32>
    %80 = math.tanh %79 : vector<2x128xf32>
    %c6_72 = arith.constant 6 : index
    %c0_73 = arith.constant 0 : index
    %81 = vector.load %arg13[%c6_72, %c0_73] : memref<16x128xf32, #tpu.memory_space<vmem>>, vector<2x128xf32>
    tpu.vector_store %arg13[%c6_72, %c0_73], %80 {strides = array<i32>} : memref<16x128xf32, #tpu.memory_space<vmem>>, vector<2x128xf32>,
    %c10 = arith.constant 10 : index
    %c0_74 = arith.constant 0 : index
    %82 = vector.load %arg12[%c10, %c0_74] : memref<16x128xf32, #tpu.memory_space<vmem>>, vector<2x128xf32>
    %c0_75 = arith.constant 0 : index
    %c0_76 = arith.constant 0 : index
    %83 = vector.load %arg4[%c0_75, %c0_76] : memref<128x128xf32, #tpu.memory_space<vmem>>, vector<128x128xf32>
    %cst_77 = arith.constant dense<0.000000e+00> : vector<2x128xf32>
    %84 = tpu.matmul %71, %83, %cst_77 {dimension_numbers = #tpu.dot_dimension_numbers<[1], [0], [0], [1], [0, 0, 1, 1], [], []>} : vector<2x128xf32>, vector<128x128xf32>, vector<2x128xf32> -> vector<2x128xf32>
    %85 = arith.addf %82, %84 : vector<2x128xf32>
    %86 = math.tanh %85 : vector<2x128xf32>
    %c0_78 = arith.constant 0 : index
    %c0_79 = arith.constant 0 : index
    %87 = vector.load %arg6[%c0_78, %c0_79] : memref<128x128xf32, #tpu.memory_space<vmem>>, vector<128x128xf32>
    %cst_80 = arith.constant dense<0.000000e+00> : vector<2x128xf32>
    %88 = tpu.matmul %71, %87, %cst_80 {dimension_numbers = #tpu.dot_dimension_numbers<[1], [0], [0], [1], [0, 0, 1, 1], [], []>} : vector<2x128xf32>, vector<128x128xf32>, vector<2x128xf32> -> vector<2x128xf32>
    %c0_81 = arith.constant 0 : index
    %c0_82 = arith.constant 0 : index
    %89 = vector.load %arg8[%c0_81, %c0_82] : memref<1x128xf32, #tpu.memory_space<vmem>>, vector<1x128xf32>
    %90 = vector.broadcast %89 : vector<1x128xf32> to vector<2x128xf32>
    %91 = arith.addf %88, %90 : vector<2x128xf32>
    %c0_83 = arith.constant 0 : index
    %c0_84 = arith.constant 0 : index
    %92 = vector.load %arg7[%c0_83, %c0_84] : memref<128x128xf32, #tpu.memory_space<vmem>>, vector<128x128xf32>
    %cst_85 = arith.constant dense<0.000000e+00> : vector<2x128xf32>
    %93 = tpu.matmul %80, %92, %cst_85 {dimension_numbers = #tpu.dot_dimension_numbers<[1], [0], [0], [1], [0, 0, 1, 1], [], []>} : vector<2x128xf32>, vector<128x128xf32>, vector<2x128xf32> -> vector<2x128xf32>
    %94 = arith.addf %91, %93 : vector<2x128xf32>
    %95 = math.tanh %94 : vector<2x128xf32>
    %c8_86 = arith.constant 8 : index
    %c0_87 = arith.constant 0 : index
    %96 = vector.load %arg13[%c8_86, %c0_87] : memref<16x128xf32, #tpu.memory_space<vmem>>, vector<2x128xf32>
    tpu.vector_store %arg13[%c8_86, %c0_87], %95 {strides = array<i32>} : memref<16x128xf32, #tpu.memory_space<vmem>>, vector<2x128xf32>,
    %c12 = arith.constant 12 : index
    %c0_88 = arith.constant 0 : index
    %97 = vector.load %arg12[%c12, %c0_88] : memref<16x128xf32, #tpu.memory_space<vmem>>, vector<2x128xf32>
    %c0_89 = arith.constant 0 : index
    %c0_90 = arith.constant 0 : index
    %98 = vector.load %arg4[%c0_89, %c0_90] : memref<128x128xf32, #tpu.memory_space<vmem>>, vector<128x128xf32>
    %cst_91 = arith.constant dense<0.000000e+00> : vector<2x128xf32>
    %99 = tpu.matmul %86, %98, %cst_91 {dimension_numbers = #tpu.dot_dimension_numbers<[1], [0], [0], [1], [0, 0, 1, 1], [], []>} : vector<2x128xf32>, vector<128x128xf32>, vector<2x128xf32> -> vector<2x128xf32>
    %100 = arith.addf %97, %99 : vector<2x128xf32>
    %101 = math.tanh %100 : vector<2x128xf32>
    %c0_92 = arith.constant 0 : index
    %c0_93 = arith.constant 0 : index
    %102 = vector.load %arg6[%c0_92, %c0_93] : memref<128x128xf32, #tpu.memory_space<vmem>>, vector<128x128xf32>
    %cst_94 = arith.constant dense<0.000000e+00> : vector<2x128xf32>
    %103 = tpu.matmul %86, %102, %cst_94 {dimension_numbers = #tpu.dot_dimension_numbers<[1], [0], [0], [1], [0, 0, 1, 1], [], []>} : vector<2x128xf32>, vector<128x128xf32>, vector<2x128xf32> -> vector<2x128xf32>
    %c0_95 = arith.constant 0 : index
    %c0_96 = arith.constant 0 : index
    %104 = vector.load %arg8[%c0_95, %c0_96] : memref<1x128xf32, #tpu.memory_space<vmem>>, vector<1x128xf32>
    %105 = vector.broadcast %104 : vector<1x128xf32> to vector<2x128xf32>
    %106 = arith.addf %103, %105 : vector<2x128xf32>
    %c0_97 = arith.constant 0 : index
    %c0_98 = arith.constant 0 : index
    %107 = vector.load %arg7[%c0_97, %c0_98] : memref<128x128xf32, #tpu.memory_space<vmem>>, vector<128x128xf32>
    %cst_99 = arith.constant dense<0.000000e+00> : vector<2x128xf32>
    %108 = tpu.matmul %95, %107, %cst_99 {dimension_numbers = #tpu.dot_dimension_numbers<[1], [0], [0], [1], [0, 0, 1, 1], [], []>} : vector<2x128xf32>, vector<128x128xf32>, vector<2x128xf32> -> vector<2x128xf32>
    %109 = arith.addf %106, %108 : vector<2x128xf32>
    %110 = math.tanh %109 : vector<2x128xf32>
    %c10_100 = arith.constant 10 : index
    %c0_101 = arith.constant 0 : index
    %111 = vector.load %arg13[%c10_100, %c0_101] : memref<16x128xf32, #tpu.memory_space<vmem>>, vector<2x128xf32>
    tpu.vector_store %arg13[%c10_100, %c0_101], %110 {strides = array<i32>} : memref<16x128xf32, #tpu.memory_space<vmem>>, vector<2x128xf32>,
    %c14 = arith.constant 14 : index
    %c0_102 = arith.constant 0 : index
    %112 = vector.load %arg12[%c14, %c0_102] : memref<16x128xf32, #tpu.memory_space<vmem>>, vector<2x128xf32>
    %c0_103 = arith.constant 0 : index
    %c0_104 = arith.constant 0 : index
    %113 = vector.load %arg4[%c0_103, %c0_104] : memref<128x128xf32, #tpu.memory_space<vmem>>, vector<128x128xf32>
    %cst_105 = arith.constant dense<0.000000e+00> : vector<2x128xf32>
    %114 = tpu.matmul %101, %113, %cst_105 {dimension_numbers = #tpu.dot_dimension_numbers<[1], [0], [0], [1], [0, 0, 1, 1], [], []>} : vector<2x128xf32>, vector<128x128xf32>, vector<2x128xf32> -> vector<2x128xf32>
    %115 = arith.addf %112, %114 : vector<2x128xf32>
    %116 = math.tanh %115 : vector<2x128xf32>
    %c0_106 = arith.constant 0 : index
    %c0_107 = arith.constant 0 : index
    %117 = vector.load %arg6[%c0_106, %c0_107] : memref<128x128xf32, #tpu.memory_space<vmem>>, vector<128x128xf32>
    %cst_108 = arith.constant dense<0.000000e+00> : vector<2x128xf32>
    %118 = tpu.matmul %101, %117, %cst_108 {dimension_numbers = #tpu.dot_dimension_numbers<[1], [0], [0], [1], [0, 0, 1, 1], [], []>} : vector<2x128xf32>, vector<128x128xf32>, vector<2x128xf32> -> vector<2x128xf32>
    %c0_109 = arith.constant 0 : index
    %c0_110 = arith.constant 0 : index
    %119 = vector.load %arg8[%c0_109, %c0_110] : memref<1x128xf32, #tpu.memory_space<vmem>>, vector<1x128xf32>
    %120 = vector.broadcast %119 : vector<1x128xf32> to vector<2x128xf32>
    %121 = arith.addf %118, %120 : vector<2x128xf32>
    %c0_111 = arith.constant 0 : index
    %c0_112 = arith.constant 0 : index
    %122 = vector.load %arg7[%c0_111, %c0_112] : memref<128x128xf32, #tpu.memory_space<vmem>>, vector<128x128xf32>
    %cst_113 = arith.constant dense<0.000000e+00> : vector<2x128xf32>
    %123 = tpu.matmul %110, %122, %cst_113 {dimension_numbers = #tpu.dot_dimension_numbers<[1], [0], [0], [1], [0, 0, 1, 1], [], []>} : vector<2x128xf32>, vector<128x128xf32>, vector<2x128xf32> -> vector<2x128xf32>
    %124 = arith.addf %121, %123 : vector<2x128xf32>
    %125 = math.tanh %124 : vector<2x128xf32>
    %c12_114 = arith.constant 12 : index
    %c0_115 = arith.constant 0 : index
    %126 = vector.load %arg13[%c12_114, %c0_115] : memref<16x128xf32, #tpu.memory_space<vmem>>, vector<2x128xf32>
    tpu.vector_store %arg13[%c12_114, %c0_115], %125 {strides = array<i32>} : memref<16x128xf32, #tpu.memory_space<vmem>>, vector<2x128xf32>,
    %c0_116 = arith.constant 0 : index
    %c0_117 = arith.constant 0 : index
    %127 = vector.load %arg6[%c0_116, %c0_117] : memref<128x128xf32, #tpu.memory_space<vmem>>, vector<128x128xf32>
    %cst_118 = arith.constant dense<0.000000e+00> : vector<2x128xf32>
    %128 = tpu.matmul %116, %127, %cst_118 {dimension_numbers = #tpu.dot_dimension_numbers<[1], [0], [0], [1], [0, 0, 1, 1], [], []>} : vector<2x128xf32>, vector<128x128xf32>, vector<2x128xf32> -> vector<2x128xf32>
    %c0_119 = arith.constant 0 : index
    %c0_120 = arith.constant 0 : index
    %129 = vector.load %arg8[%c0_119, %c0_120] : memref<1x128xf32, #tpu.memory_space<vmem>>, vector<1x128xf32>
    %130 = vector.broadcast %129 : vector<1x128xf32> to vector<2x128xf32>
    %131 = arith.addf %128, %130 : vector<2x128xf32>
    %c0_121 = arith.constant 0 : index
    %c0_122 = arith.constant 0 : index
    %132 = vector.load %arg7[%c0_121, %c0_122] : memref<128x128xf32, #tpu.memory_space<vmem>>, vector<128x128xf32>
    %cst_123 = arith.constant dense<0.000000e+00> : vector<2x128xf32>
    %133 = tpu.matmul %125, %132, %cst_123 {dimension_numbers = #tpu.dot_dimension_numbers<[1], [0], [0], [1], [0, 0, 1, 1], [], []>} : vector<2x128xf32>, vector<128x128xf32>, vector<2x128xf32> -> vector<2x128xf32>
    %134 = arith.addf %131, %133 : vector<2x128xf32>
    %135 = math.tanh %134 : vector<2x128xf32>
    %c14_124 = arith.constant 14 : index
    %c0_125 = arith.constant 0 : index
    %136 = vector.load %arg13[%c14_124, %c0_125] : memref<16x128xf32, #tpu.memory_space<vmem>>, vector<2x128xf32>
    tpu.vector_store %arg13[%c14_124, %c0_125], %135 {strides = array<i32>} : memref<16x128xf32, #tpu.memory_space<vmem>>, vector<2x128xf32>,
    %c0_126 = arith.constant 0 : index
    %c0_127 = arith.constant 0 : index
    %137 = vector.load %arg13[%c0_126, %c0_127] : memref<16x128xf32, #tpu.memory_space<vmem>>, vector<16x128xf32>
    %c0_128 = arith.constant 0 : index
    %c0_129 = arith.constant 0 : index
    %138 = vector.load %arg9[%c0_128, %c0_129] : memref<128x128xf32, #tpu.memory_space<vmem>>, vector<128x128xf32>
    %cst_130 = arith.constant dense<0.000000e+00> : vector<16x128xf32>
    %139 = tpu.matmul %137, %138, %cst_130 {dimension_numbers = #tpu.dot_dimension_numbers<[1], [0], [0], [1], [0, 0, 1, 1], [], []>} : vector<16x128xf32>, vector<128x128xf32>, vector<16x128xf32> -> vector<16x128xf32>
    %c0_131 = arith.constant 0 : index
    %c0_132 = arith.constant 0 : index
    %140 = vector.load %arg10[%c0_131, %c0_132] : memref<1x128xf32, #tpu.memory_space<vmem>>, vector<1x128xf32>
    %141 = vector.broadcast %140 : vector<1x128xf32> to vector<16x128xf32>
    %142 = arith.addf %139, %141 : vector<16x128xf32>
    %c0_133 = arith.constant 0 : index
    %c0_134 = arith.constant 0 : index
    %c0_135 = arith.constant 0 : index
    %143 = vector.load %arg11[%c0_133, %c0_134, %c0_135] : memref<1x16x128xf32, #tpu.memory_space<vmem>>, vector<1x16x128xf32>
    %144 = vector.shape_cast %143 : vector<1x16x128xf32> to vector<16x128xf32>
    %145 = vector.shape_cast %142 : vector<16x128xf32> to vector<1x16x128xf32>
    tpu.vector_store %arg11[%c0_133, %c0_134, %c0_135], %145 {strides = array<i32>} : memref<1x16x128xf32, #tpu.memory_space<vmem>>, vector<1x16x128xf32>,
    return
  }
  func.func @transform_0(%arg0: i32) -> (i32, i32, i32) {
    %c0_i32 = arith.constant 0 : i32
    %c0_i32_0 = arith.constant 0 : i32
    %c0_i32_1 = arith.constant 0 : i32
    return %arg0, %c0_i32, %c0_i32_0 : i32, i32, i32
  }
  func.func @transform_1(%arg0: i32) -> (i32, i32) {
    %c0_i32 = arith.constant 0 : i32
    %c0_i32_0 = arith.constant 0 : i32
    %c0_i32_1 = arith.constant 0 : i32
    return %c0_i32, %c0_i32_0 : i32, i32
  }
  func.func @transform_2(%arg0: i32) -> (i32, i32) {
    %c0_i32 = arith.constant 0 : i32
    %c0_i32_0 = arith.constant 0 : i32
    %c0_i32_1 = arith.constant 0 : i32
    return %c0_i32, %c0_i32_0 : i32, i32
  }
  func.func @transform_3(%arg0: i32) -> (i32, i32) {
    %c0_i32 = arith.constant 0 : i32
    %c0_i32_0 = arith.constant 0 : i32
    %c0_i32_1 = arith.constant 0 : i32
    return %c0_i32, %c0_i32_0 : i32, i32
  }
  func.func @transform_4(%arg0: i32) -> (i32, i32) {
    %c0_i32 = arith.constant 0 : i32
    %c0_i32_0 = arith.constant 0 : i32
    %c0_i32_1 = arith.constant 0 : i32
    return %c0_i32, %c0_i32_0 : i32, i32
  }
  func.func @transform_5(%arg0: i32) -> (i32, i32) {
    %c0_i32 = arith.constant 0 : i32
    %c0_i32_0 = arith.constant 0 : i32
    %c0_i32_1 = arith.constant 0 : i32
    return %c0_i32, %c0_i32_0 : i32, i32
  }
  func.func @transform_6(%arg0: i32) -> (i32, i32) {
    %c0_i32 = arith.constant 0 : i32
    %c0_i32_0 = arith.constant 0 : i32
    %c0_i32_1 = arith.constant 0 : i32
    return %c0_i32, %c0_i32_0 : i32, i32
  }
  func.func @transform_7(%arg0: i32) -> (i32, i32) {
    %c0_i32 = arith.constant 0 : i32
    %c0_i32_0 = arith.constant 0 : i32
    %c0_i32_1 = arith.constant 0 : i32
    return %c0_i32, %c0_i32_0 : i32, i32
  }
  func.func @transform_8(%arg0: i32) -> (i32, i32) {
    %c0_i32 = arith.constant 0 : i32
    %c0_i32_0 = arith.constant 0 : i32
    %c0_i32_1 = arith.constant 0 : i32
    return %c0_i32, %c0_i32_0 : i32, i32
  }
  func.func @transform_9(%arg0: i32) -> (i32, i32) {
    %c0_i32 = arith.constant 0 : i32
    %c0_i32_0 = arith.constant 0 : i32
    %c0_i32_1 = arith.constant 0 : i32
    return %c0_i32, %c0_i32_0 : i32, i32
  }
  func.func @transform_10(%arg0: i32) -> (i32, i32, i32) {
    %c0_i32 = arith.constant 0 : i32
    %c0_i32_0 = arith.constant 0 : i32
    %c0_i32_1 = arith.constant 0 : i32
    return %arg0, %c0_i32, %c0_i32_0 : i32, i32, i32
  }
}

</mosaic_0001>

<llo_original>
// kernel: torch_model_forward.1
$region0: #{torch_model_forward.1}
  #allocation0 [shape = 'u32[]', space=smem, size = 0x4, offset = 0x4, fixed_abs, tag = 'smem constant byte address 0x4 - core index']
  #allocation1 [shape = 'u32[72,128]{1,0:T(1,128)}', space=vmem, size = 0x9000, scoped, tag = 'internal scratch']
  #allocation2 [shape = 'f32[16,128]{1,0:T(8,128)}', space=vmem, size = 0x2000, scoped, tag = 'scratch operand']
  #allocation3 [shape = 'f32[16,128]{1,0:T(8,128)}', space=vmem, size = 0x2000, scoped, tag = 'scratch operand']
  %s0 = inlined_call_operand.vmem [shape: s32[1,16,1], index: 0, kind: input, shape index: {}]
  %s1 = inlined_call_operand.hbm [shape: f32[24,32], index: 1, kind: input, shape index: {}]
  %s2 = inlined_call_operand.vmem [shape: f32[32,128], index: 2, kind: input, shape index: {}]
  %s3 = inlined_call_operand.hbm [shape: f32[128,128], index: 3, kind: input, shape index: {}]
  %s4 = inlined_call_operand.vmem [shape: f32[1,128], index: 4, kind: input, shape index: {}]
  %s5 = inlined_call_operand.hbm [shape: f32[128,128], index: 5, kind: input, shape index: {}]
  %s6 = inlined_call_operand.hbm [shape: f32[128,128], index: 6, kind: input, shape index: {}]
  %s7 = inlined_call_operand.vmem [shape: f32[1,128], index: 7, kind: input, shape index: {}]
  %s8 = inlined_call_operand.hbm [shape: f32[128,128], index: 8, kind: input, shape index: {}]
  %s9 = inlined_call_operand.vmem [shape: f32[1,128], index: 9, kind: input, shape index: {}]
  %s10 = inlined_call_operand.vmem [shape: f32[1,16,128], index: 10, kind: output, shape index: {}]
  %s11 = sld [smem:[#allocation0]]
  $region70: #{torch_model_forward.1} parent=0
    _
  %s13 = ssub.s32 1, %s11
  %s14 = scalar_select 0, %s13, %s11
  $region1: #{torch_model_forward.1} parent=0
    #allocation4 [shape = 'u8[12288]{0}', space=vmem, size = 0x3000, scoped, tag = 'input window, operand 1, single buffered']
    #allocation5 [shape = 's32[1]{0}', space=sflag, size = 0x4, scoped, tag = 'scoped memory for torch_model_forward.1']
    #allocation6 [shape = 'u8[65536]{0}', space=vmem, size = 0x10000, scoped, tag = 'input window, operand 3, single buffered']
    #allocation7 [shape = 's32[1]{0}', space=sflag, size = 0x4, scoped, tag = 'scoped memory for torch_model_forward.1']
    #allocation8 [shape = 'u8[65536]{0}', space=vmem, size = 0x10000, scoped, tag = 'input window, operand 5, single buffered']
    #allocation9 [shape = 'u8[65536]{0}', space=vmem, size = 0x10000, scoped, tag = 'input window, operand 6, single buffered']
    #allocation10 [shape = 's32[1]{0}', space=sflag, size = 0x4, scoped, tag = 'scoped memory for torch_model_forward.1']
    #allocation11 [shape = 'u8[65536]{0}', space=vmem, size = 0x10000, scoped, tag = 'input window, operand 8, single buffered']
    %15 = vsyncpa [#allocation5], 0
    %16 = vsyncpa [#allocation7], 0
    %17 = vsyncpa [#allocation10], 0
    // Predicated region
    $region2: #{torch_model_forward.1} parent=1 // pred_check
      _
    $region3: #{torch_model_forward.1} parent=1 // pred_check_branch
      %19 = sbr.rel (0) target = $region5
    $region4: #{torch_model_forward.1} parent=1 // pred_region
      _
    $region5: #{torch_model_forward.1} parent=1 // pred_fallthru
      _
    // Predicated region
    $region6: #{torch_model_forward.1} parent=1 // pred_check
      _
    $region7: #{torch_model_forward.1} parent=1 // pred_check_branch
      %21 = sbr.rel (0) target = $region9
    $region8: #{torch_model_forward.1} parent=1 // pred_region
      %23 = vsyncadd [#allocation5], 0
      %s24 = sshll.u32 %s1, 4
      %s25 = int_to_ptr.hbm [resolvable:$true] %s24
      %s26 = sshll.u32 [#allocation4], 4
      %s27 = int_to_ptr.vmem [resolvable:$true] %s26
      %32 = dma.hbm_to_vmem [thread:$0]  %s25, 384, %s27, [#allocation5], 128, 128, 8
    $region9: #{torch_model_forward.1} parent=1 // pred_fallthru
      _
    // Predicated region
    $region10: #{torch_model_forward.1} parent=1 // pred_check
      _
    $region11: #{torch_model_forward.1} parent=1 // pred_check_branch
      %34 = sbr.rel (0) target = $region13
    $region12: #{torch_model_forward.1} parent=1 // pred_region
      _
    $region13: #{torch_model_forward.1} parent=1 // pred_fallthru
      _
    // Predicated region
    $region14: #{torch_model_forward.1} parent=1 // pred_check
      _
    $region15: #{torch_model_forward.1} parent=1 // pred_check_branch
      %36 = sbr.rel (0) target = $region17
    $region16: #{torch_model_forward.1} parent=1 // pred_region
      %38 = vsyncadd [#allocation7], 0
      %s39 = sshll.u32 %s3, 4
      %s40 = int_to_ptr.hbm [resolvable:$true] %s39
      %s41 = sshll.u32 [#allocation6], 4
      %s42 = int_to_ptr.vmem [resolvable:$true] %s41
      %47 = dma.hbm_to_vmem [thread:$0]  %s40, 2048, %s42, [#allocation7], 128, 128, 8
    $region17: #{torch_model_forward.1} parent=1 // pred_fallthru
      _
    // Predicated region
    $region18: #{torch_model_forward.1} parent=1 // pred_check
      _
    $region19: #{torch_model_forward.1} parent=1 // pred_check_branch
      %49 = sbr.rel (0) target = $region21
    $region20: #{torch_model_forward.1} parent=1 // pred_region
      _
    $region21: #{torch_model_forward.1} parent=1 // pred_fallthru
      _
    // Predicated region
    $region22: #{torch_model_forward.1} parent=1 // pred_check
      _
    $region23: #{torch_model_forward.1} parent=1 // pred_check_branch
      %51 = sbr.rel (0) target = $region25
    $region24: #{torch_model_forward.1} parent=1 // pred_region
      %53 = vsyncadd [#allocation7], 0
      %s54 = sshll.u32 %s5, 4
      %s55 = int_to_ptr.hbm [resolvable:$true] %s54
      %s56 = sshll.u32 [#allocation8], 4
      %s57 = int_to_ptr.vmem [resolvable:$true] %s56
      %62 = dma.hbm_to_vmem [thread:$0]  %s55, 2048, %s57, [#allocation7], 128, 128, 8
    $region25: #{torch_model_forward.1} parent=1 // pred_fallthru
      _
    // Predicated region
    $region26: #{torch_model_forward.1} parent=1 // pred_check
      _
    $region27: #{torch_model_forward.1} parent=1 // pred_check_branch
      %64 = sbr.rel (0) target = $region29
    $region28: #{torch_model_forward.1} parent=1 // pred_region
      %66 = vsyncadd [#allocation10], 0
      %s67 = sshll.u32 %s6, 4
      %s68 = int_to_ptr.hbm [resolvable:$true] %s67
      %s69 = sshll.u32 [#allocation9], 4
      %s70 = int_to_ptr.vmem [resolvable:$true] %s69
      %75 = dma.hbm_to_vmem [thread:$0]  %s68, 2048, %s70, [#allocation10], 128, 128, 8
    $region29: #{torch_model_forward.1} parent=1 // pred_fallthru
      _
    // Predicated region
    $region30: #{torch_model_forward.1} parent=1 // pred_check
      _
    $region31: #{torch_model_forward.1} parent=1 // pred_check_branch
      %77 = sbr.rel (0) target = $region33
    $region32: #{torch_model_forward.1} parent=1 // pred_region
      _
    $region33: #{torch_model_forward.1} parent=1 // pred_fallthru
      _
    // Predicated region
    $region34: #{torch_model_forward.1} parent=1 // pred_check
      _
    $region35: #{torch_model_forward.1} parent=1 // pred_check_branch
      %79 = sbr.rel (0) target = $region37
    $region36: #{torch_model_forward.1} parent=1 // pred_region
      %81 = vsyncadd [#allocation10], 0
      %s82 = sshll.u32 %s8, 4
      %s83 = int_to_ptr.hbm [resolvable:$true] %s82
      %s84 = sshll.u32 [#allocation11], 4
      %s85 = int_to_ptr.vmem [resolvable:$true] %s84
      %90 = dma.hbm_to_vmem [thread:$0]  %s83, 2048, %s85, [#allocation10], 128, 128, 8
    $region37: #{torch_model_forward.1} parent=1 // pred_fallthru
      _
    // Predicated region
    $region38: #{torch_model_forward.1} parent=1 // pred_check
      _
    $region39: #{torch_model_forward.1} parent=1 // pred_check_branch
      %92 = sbr.rel (0) target = $region41
    $region40: #{torch_model_forward.1} parent=1 // pred_region
      _
    $region41: #{torch_model_forward.1} parent=1 // pred_fallthru
      _
    // Predicated region
    $region42: #{torch_model_forward.1} parent=1 // pred_check
      _
    $region43: #{torch_model_forward.1} parent=1 // pred_check_branch
      %94 = sbr.rel (0) target = $region45
    $region44: #{torch_model_forward.1} parent=1 // pred_region
      %96 = dma.done [#allocation5], 384
    $region45: #{torch_model_forward.1} parent=1 // pred_fallthru
      _
    // Predicated region
    $region46: #{torch_model_forward.1} parent=1 // pred_check
      _
    $region47: #{torch_model_forward.1} parent=1 // pred_check_branch
      %98 = sbr.rel (0) target = $region49
    $region48: #{torch_model_forward.1} parent=1 // pred_region
      %100 = dma.done [#allocation7], 2048
    $region49: #{torch_model_forward.1} parent=1 // pred_fallthru
      _
    // Predicated region
    $region50: #{torch_model_forward.1} parent=1 // pred_check
      _
    $region51: #{torch_model_forward.1} parent=1 // pred_check_branch
      %102 = sbr.rel (0) target = $region53
    $region52: #{torch_model_forward.1} parent=1 // pred_region
      %104 = dma.done [#allocation7], 2048
    $region53: #{torch_model_forward.1} parent=1 // pred_fallthru
      _
    // Predicated region
    $region54: #{torch_model_forward.1} parent=1 // pred_check
      _
    $region55: #{torch_model_forward.1} parent=1 // pred_check_branch
      %106 = sbr.rel (0) target = $region57
    $region56: #{torch_model_forward.1} parent=1 // pred_region
      %108 = dma.done [#allocation10], 2048
    $region57: #{torch_model_forward.1} parent=1 // pred_fallthru
      _
    // Predicated region
    $region58: #{torch_model_forward.1} parent=1 // pred_check
      _
    $region59: #{torch_model_forward.1} parent=1 // pred_check_branch
      %110 = sbr.rel (0) target = $region61
    $region60: #{torch_model_forward.1} parent=1 // pred_region
      %112 = dma.done [#allocation10], 2048
    $region61: #{torch_model_forward.1} parent=1 // pred_fallthru
      _
    %v113 = vld [vmem:[#allocation4] sm:$0xff]
    %v114 = vld [vmem:[#allocation4 + $0x8] sm:$0xff]
    %v115 = vld [vmem:[#allocation4 + $0x10] sm:$0xff]
    %v116 = vld [vmem:[%s2] sm:$0xff]
    %v117 = vld [vmem:[%s2 + $0x8] sm:$0xff]
    %v118 = vld [vmem:[%s2 + $0x10] sm:$0xff]
    %v119 = vld [vmem:[%s2 + $0x18] sm:$0xff]
    %vm120 = vcmask 261120
    %v122 = vsel %vm120, %v113, 0
    %v125 = vsel %vm120, %v114, 0
    %v128 = vsel %vm120, %v115, 0
    %130 = vmatpush.msra.mxu0 0.0
    %131 = vmatpush.msra.mxu0 0.0
    %132 = vmatpush.msra.mxu0 0.0
    %133 = vmatpush.msra.mxu0 0.0
    %134 = vmatpush.msra.mxu0 0.0
    %135 = vmatpush.msra.mxu0 0.0
    %136 = vmatpush.msra.mxu0 0.0
    %137 = vmatpush.msra.mxu0 0.0
    %138 = vmatpush.msra.mxu0 0.0
    %139 = vmatpush.msra.mxu0 0.0
    %140 = vmatpush.msra.mxu0 0.0
    %141 = vmatpush.msra.mxu0 0.0
    %142 = vmatpush.msra.mxu0 %v119
    %143 = vmatpush.msra.mxu0 %v118
    %144 = vmatpush.msra.mxu0 %v117
    %145 = vmatpush.msra.mxu0 %v116
    %146 = vmatmul.f32.gmra.mxu0 %v122
    %v147 = vpop.f32.mrf.mxu0
    %v148 = vadd.f32 0.0, %v147
    %149 = vmatmul.f32.gmra.mxu0 %v125
    %v150 = vpop.f32.mrf.mxu0
    %v151 = vadd.f32 0.0, %v150
    %152 = vmatmul.f32.gmra.mxu0 %v128
    %v153 = vpop.f32.mrf.mxu0
    %v154 = vadd.f32 0.0, %v153
    %155 = vdwg.mxu0
    %v156 = vld [vmem:[%s0] sm:$0xff]
    %v157 = vld [vmem:[%s0 + $0x8] sm:$0xff]
    %v158 = vlaneseq
    %v159 = vand.u32 %v158, 127
    %160 = vset.pattern.permute.xlu0 0
    %161 = vperm.xlu0 %160, %v156
    %v162 = vpop.permute.xlu0 %161
    %163 = vset.pattern.permute.xlu0 0
    %164 = vperm.xlu0 %163, %v157
    %v165 = vpop.permute.xlu0 %164
    %vm166 = vcmp.eq.s32.totalorder %v162, %v159
    %vm167 = vcmp.eq.s32.totalorder %v165, %v159
    %v168 = vsel %vm166, 1, 0
    %v169 = vsel %vm167, 1, 0
    %v170 = vcvt.s32.f32 %v168
    %v171 = vcvt.s32.f32 %v169
    %v172 = vld [vmem:[%s4] sm:$0x1]
    %v174 = vperm.slane %v172, 0
    %vm176 = vcmask 195584
    %v178 = vsel %vm176, %v170, 0
    %v181 = vsel %vm176, %v171, 0
    %183 = vmatpush.msra.mxu0 0.0
    %184 = vmatpush.msra.mxu0 0.0
    %185 = vmatpush.msra.mxu0 0.0
    %186 = vmatpush.msra.mxu0 0.0
    %187 = vmatpush.msra.mxu0 0.0
    %188 = vmatpush.msra.mxu0 0.0
    %189 = vmatpush.msra.mxu0 0.0
    %190 = vmatpush.msra.mxu0 0.0
    %191 = vmatpush.msra.mxu0 0.0
    %192 = vmatpush.msra.mxu0 0.0
    %193 = vmatpush.msra.mxu0 0.0
    %194 = vmatpush.msra.mxu0 0.0
    %195 = vmatpush.msra.mxu0 0.0
    %196 = vmatpush.msra.mxu0 %v154
    %197 = vmatpush.msra.mxu0 %v151
    %198 = vmatpush.msra.mxu0 %v148
    %199 = vmatmul.f32.gmra.mxu0 %v178
    %v200 = vpop.f32.mrf.mxu0
    %v201 = vadd.f32 %v174, %v200
    %202 = vmatmul.f32.gmra.mxu0 %v181
    %v203 = vpop.f32.mrf.mxu0
    %v204 = vadd.f32 %v174, %v203
    %205 = vdwg.mxu0
    %206 = vst [vmem:[#allocation2] sm:$0xff] %v201
    %207 = vst [vmem:[#allocation2 + $0x8] sm:$0xff] %v204
    %v208 = vld [vmem:[#allocation2] sm:$0x3]
    %v209 = vld [vmem:[#allocation6] sm:$0xff]
    %v210 = vld [vmem:[#allocation6 + $0x8] sm:$0xff]
    %v211 = vld [vmem:[#allocation6 + $0x10] sm:$0xff]
    %v212 = vld [vmem:[#allocation6 + $0x18] sm:$0xff]
    %v213 = vld [vmem:[#allocation6 + $0x20] sm:$0xff]
    %v214 = vld [vmem:[#allocation6 + $0x28] sm:$0xff]
    %v215 = vld [vmem:[#allocation6 + $0x30] sm:$0xff]
    %v216 = vld [vmem:[#allocation6 + $0x38] sm:$0xff]
    %v217 = vld [vmem:[#allocation6 + $0x40] sm:$0xff]
    %v218 = vld [vmem:[#allocation6 + $0x48] sm:$0xff]
    %v219 = vld [vmem:[#allocation6 + $0x50] sm:$0xff]
    %v220 = vld [vmem:[#allocation6 + $0x58] sm:$0xff]
    %v221 = vld [vmem:[#allocation6 + $0x60] sm:$0xff]
    %v222 = vld [vmem:[#allocation6 + $0x68] sm:$0xff]
    %v223 = vld [vmem:[#allocation6 + $0x70] sm:$0xff]
    %v224 = vld [vmem:[#allocation6 + $0x78] sm:$0xff]
    %225 = vmatpush.msra.mxu0 %v224
    %226 = vmatpush.msra.mxu0 %v223
    %227 = vmatpush.msra.mxu0 %v222
    %228 = vmatpush.msra.mxu0 %v221
    %229 = vmatpush.msra.mxu0 %v220
    %230 = vmatpush.msra.mxu0 %v219
    %231 = vmatpush.msra.mxu0 %v218
    %232 = vmatpush.msra.mxu0 %v217
    %233 = vmatpush.msra.mxu0 %v216
    %234 = vmatpush.msra.mxu0 %v215
    %235 = vmatpush.msra.mxu0 %v214
    %236 = vmatpush.msra.mxu0 %v213
    %237 = vmatpush.msra.mxu0 %v212
    %238 = vmatpush.msra.mxu0 %v211
    %239 = vmatpush.msra.mxu0 %v210
    %240 = vmatpush.msra.mxu0 %v209
    %241 = vmatmul.f32.gmra.mxu0 0.0
    %v242 = vpop.f32.mrf.mxu0
    %v243 = vadd.f32 0.0, %v242
    %244 = vdwg.mxu0
    %v245 = vadd.f32 %v208, %v243
    %v246 = vtanh.pop %v245
    %v247 = vld [vmem:[#allocation2 + $0x2] sm:$0x3]
    %248 = vmatpush.msra.mxu0 %v224
    %249 = vmatpush.msra.mxu0 %v223
    %250 = vmatpush.msra.mxu0 %v222
    %251 = vmatpush.msra.mxu0 %v221
    %252 = vmatpush.msra.mxu0 %v220
    %253 = vmatpush.msra.mxu0 %v219
    %254 = vmatpush.msra.mxu0 %v218
    %255 = vmatpush.msra.mxu0 %v217
    %256 = vmatpush.msra.mxu0 %v216
    %257 = vmatpush.msra.mxu0 %v215
    %258 = vmatpush.msra.mxu0 %v214
    %259 = vmatpush.msra.mxu0 %v213
    %260 = vmatpush.msra.mxu0 %v212
    %261 = vmatpush.msra.mxu0 %v211
    %262 = vmatpush.msra.mxu0 %v210
    %263 = vmatpush.msra.mxu0 %v209
    %264 = vmatmul.f32.gmra.mxu0 %v246
    %v265 = vpop.f32.mrf.mxu0
    %v266 = vadd.f32 0.0, %v265
    %267 = vdwg.mxu0
    %v268 = vadd.f32 %v247, %v266
    %v269 = vtanh.pop %v268
    %v270 = vld [vmem:[#allocation8] sm:$0xff]
    %v271 = vld [vmem:[#allocation8 + $0x8] sm:$0xff]
    %v272 = vld [vmem:[#allocation8 + $0x10] sm:$0xff]
    %v273 = vld [vmem:[#allocation8 + $0x18] sm:$0xff]
    %v274 = vld [vmem:[#allocation8 + $0x20] sm:$0xff]
    %v275 = vld [vmem:[#allocation8 + $0x28] sm:$0xff]
    %v276 = vld [vmem:[#allocation8 + $0x30] sm:$0xff]
    %v277 = vld [vmem:[#allocation8 + $0x38] sm:$0xff]
    %v278 = vld [vmem:[#allocation8 + $0x40] sm:$0xff]
    %v279 = vld [vmem:[#allocation8 + $0x48] sm:$0xff]
    %v280 = vld [vmem:[#allocation8 + $0x50] sm:$0xff]
    %v281 = vld [vmem:[#allocation8 + $0x58] sm:$0xff]
    %v282 = vld [vmem:[#allocation8 + $0x60] sm:$0xff]
    %v283 = vld [vmem:[#allocation8 + $0x68] sm:$0xff]
    %v284 = vld [vmem:[#allocation8 + $0x70] sm:$0xff]
    %v285 = vld [vmem:[#allocation8 + $0x78] sm:$0xff]
    %v286 = vld [vmem:[%s7] sm:$0x1]
    %v288 = vperm.slane %v286, 0
    %290 = vmatpush.msra.mxu0 %v285
    %291 = vmatpush.msra.mxu0 %v284
    %292 = vmatpush.msra.mxu0 %v283
    %293 = vmatpush.msra.mxu0 %v282
    %294 = vmatpush.msra.mxu0 %v281
    %295 = vmatpush.msra.mxu0 %v280
    %296 = vmatpush.msra.mxu0 %v279
    %297 = vmatpush.msra.mxu0 %v278
    %298 = vmatpush.msra.mxu0 %v277
    %299 = vmatpush.msra.mxu0 %v276
    %300 = vmatpush.msra.mxu0 %v275
    %301 = vmatpush.msra.mxu0 %v274
    %302 = vmatpush.msra.mxu0 %v273
    %303 = vmatpush.msra.mxu0 %v272
    %304 = vmatpush.msra.mxu0 %v271
    %305 = vmatpush.msra.mxu0 %v270
    %306 = vmatmul.f32.gmra.mxu0 %v246
    %v307 = vpop.f32.mrf.mxu0
    %v308 = vadd.f32 %v288, %v307
    %309 = vdwg.mxu0
    %v310 = vld [vmem:[#allocation9] sm:$0xff]
    %v311 = vld [vmem:[#allocation9 + $0x8] sm:$0xff]
    %v312 = vld [vmem:[#allocation9 + $0x10] sm:$0xff]
    %v313 = vld [vmem:[#allocation9 + $0x18] sm:$0xff]
    %v314 = vld [vmem:[#allocation9 + $0x20] sm:$0xff]
    %v315 = vld [vmem:[#allocation9 + $0x28] sm:$0xff]
    %v316 = vld [vmem:[#allocation9 + $0x30] sm:$0xff]
    %v317 = vld [vmem:[#allocation9 + $0x38] sm:$0xff]
    %v318 = vld [vmem:[#allocation9 + $0x40] sm:$0xff]
    %v319 = vld [vmem:[#allocation9 + $0x48] sm:$0xff]
    %v320 = vld [vmem:[#allocation9 + $0x50] sm:$0xff]
    %v321 = vld [vmem:[#allocation9 + $0x58] sm:$0xff]
    %v322 = vld [vmem:[#allocation9 + $0x60] sm:$0xff]
    %v323 = vld [vmem:[#allocation9 + $0x68] sm:$0xff]
    %v324 = vld [vmem:[#allocation9 + $0x70] sm:$0xff]
    %v325 = vld [vmem:[#allocation9 + $0x78] sm:$0xff]
    %326 = vmatpush.msra.mxu0 %v325
    %327 = vmatpush.msra.mxu0 %v324
    %328 = vmatpush.msra.mxu0 %v323
    %329 = vmatpush.msra.mxu0 %v322
    %330 = vmatpush.msra.mxu0 %v321
    %331 = vmatpush.msra.mxu0 %v320
    %332 = vmatpush.msra.mxu0 %v319
    %333 = vmatpush.msra.mxu0 %v318
    %334 = vmatpush.msra.mxu0 %v317
    %335 = vmatpush.msra.mxu0 %v316
    %336 = vmatpush.msra.mxu0 %v315
    %337 = vmatpush.msra.mxu0 %v314
    %338 = vmatpush.msra.mxu0 %v313
    %339 = vmatpush.msra.mxu0 %v312
    %340 = vmatpush.msra.mxu0 %v311
    %341 = vmatpush.msra.mxu0 %v310
    %342 = vmatmul.f32.gmra.mxu0 0.0
    %v343 = vpop.f32.mrf.mxu0
    %v344 = vadd.f32 0.0, %v343
    %345 = vdwg.mxu0
    %v346 = vadd.f32 %v308, %v344
    %v347 = vtanh.pop %v346
    %348 = vst [vmem:[#allocation3] sm:$0x3] %v347
    %v349 = vld [vmem:[#allocation2 + $0x4] sm:$0x3]
    %v350 = vld [vmem:[#allocation6] sm:$0xff]
    %v351 = vld [vmem:[#allocation6 + $0x8] sm:$0xff]
    %v352 = vld [vmem:[#allocation6 + $0x10] sm:$0xff]
    %v353 = vld [vmem:[#allocation6 + $0x18] sm:$0xff]
    %v354 = vld [vmem:[#allocation6 + $0x20] sm:$0xff]
    %v355 = vld [vmem:[#allocation6 + $0x28] sm:$0xff]
    %v356 = vld [vmem:[#allocation6 + $0x30] sm:$0xff]
    %v357 = vld [vmem:[#allocation6 + $0x38] sm:$0xff]
    %v358 = vld [vmem:[#allocation6 + $0x40] sm:$0xff]
    %v359 = vld [vmem:[#allocation6 + $0x48] sm:$0xff]
    %v360 = vld [vmem:[#allocation6 + $0x50] sm:$0xff]
    %v361 = vld [vmem:[#allocation6 + $0x58] sm:$0xff]
    %v362 = vld [vmem:[#allocation6 + $0x60] sm:$0xff]
    %v363 = vld [vmem:[#allocation6 + $0x68] sm:$0xff]
    %v364 = vld [vmem:[#allocation6 + $0x70] sm:$0xff]
    %v365 = vld [vmem:[#allocation6 + $0x78] sm:$0xff]
    %366 = vmatpush.msra.mxu0 %v365
    %367 = vmatpush.msra.mxu0 %v364
    %368 = vmatpush.msra.mxu0 %v363
    %369 = vmatpush.msra.mxu0 %v362
    %370 = vmatpush.msra.mxu0 %v361
    %371 = vmatpush.msra.mxu0 %v360
    %372 = vmatpush.msra.mxu0 %v359
    %373 = vmatpush.msra.mxu0 %v358
    %374 = vmatpush.msra.mxu0 %v357
    %375 = vmatpush.msra.mxu0 %v356
    %376 = vmatpush.msra.mxu0 %v355
    %377 = vmatpush.msra.mxu0 %v354
    %378 = vmatpush.msra.mxu0 %v353
    %379 = vmatpush.msra.mxu0 %v352
    %380 = vmatpush.msra.mxu0 %v351
    %381 = vmatpush.msra.mxu0 %v350
    %382 = vmatmul.f32.gmra.mxu0 %v269
    %v383 = vpop.f32.mrf.mxu0
    %v384 = vadd.f32 0.0, %v383
    %385 = vdwg.mxu0
    %v386 = vadd.f32 %v349, %v384
    %v387 = vtanh.pop %v386
    %v388 = vld [vmem:[#allocation8] sm:$0xff]
    %v389 = vld [vmem:[#allocation8 + $0x8] sm:$0xff]
    %v390 = vld [vmem:[#allocation8 + $0x10] sm:$0xff]
    %v391 = vld [vmem:[#allocation8 + $0x18] sm:$0xff]
    %v392 = vld [vmem:[#allocation8 + $0x20] sm:$0xff]
    %v393 = vld [vmem:[#allocation8 + $0x28] sm:$0xff]
    %v394 = vld [vmem:[#allocation8 + $0x30] sm:$0xff]
    %v395 = vld [vmem:[#allocation8 + $0x38] sm:$0xff]
    %v396 = vld [vmem:[#allocation8 + $0x40] sm:$0xff]
    %v397 = vld [vmem:[#allocation8 + $0x48] sm:$0xff]
    %v398 = vld [vmem:[#allocation8 + $0x50] sm:$0xff]
    %v399 = vld [vmem:[#allocation8 + $0x58] sm:$0xff]
    %v400 = vld [vmem:[#allocation8 + $0x60] sm:$0xff]
    %v401 = vld [vmem:[#allocation8 + $0x68] sm:$0xff]
    %v402 = vld [vmem:[#allocation8 + $0x70] sm:$0xff]
    %v403 = vld [vmem:[#allocation8 + $0x78] sm:$0xff]
    %v404 = vld [vmem:[%s7] sm:$0x1]
    %v406 = vperm.slane %v404, 0
    %408 = vmatpush.msra.mxu0 %v403
    %409 = vmatpush.msra.mxu0 %v402
    %410 = vmatpush.msra.mxu0 %v401
    %411 = vmatpush.msra.mxu0 %v400
    %412 = vmatpush.msra.mxu0 %v399
    %413 = vmatpush.msra.mxu0 %v398
    %414 = vmatpush.msra.mxu0 %v397
    %415 = vmatpush.msra.mxu0 %v396
    %416 = vmatpush.msra.mxu0 %v395
    %417 = vmatpush.msra.mxu0 %v394
    %418 = vmatpush.msra.mxu0 %v393
    %419 = vmatpush.msra.mxu0 %v392
    %420 = vmatpush.msra.mxu0 %v391
    %421 = vmatpush.msra.mxu0 %v390
    %422 = vmatpush.msra.mxu0 %v389
    %423 = vmatpush.msra.mxu0 %v388
    %424 = vmatmul.f32.gmra.mxu0 %v269
    %v425 = vpop.f32.mrf.mxu0
    %v426 = vadd.f32 %v406, %v425
    %427 = vdwg.mxu0
    %v428 = vld [vmem:[#allocation9] sm:$0xff]
    %v429 = vld [vmem:[#allocation9 + $0x8] sm:$0xff]
    %v430 = vld [vmem:[#allocation9 + $0x10] sm:$0xff]
    %v431 = vld [vmem:[#allocation9 + $0x18] sm:$0xff]
    %v432 = vld [vmem:[#allocation9 + $0x20] sm:$0xff]
    %v433 = vld [vmem:[#allocation9 + $0x28] sm:$0xff]
    %v434 = vld [vmem:[#allocation9 + $0x30] sm:$0xff]
    %v435 = vld [vmem:[#allocation9 + $0x38] sm:$0xff]
    %v436 = vld [vmem:[#allocation9 + $0x40] sm:$0xff]
    %v437 = vld [vmem:[#allocation9 + $0x48] sm:$0xff]
    %v438 = vld [vmem:[#allocation9 + $0x50] sm:$0xff]
    %v439 = vld [vmem:[#allocation9 + $0x58] sm:$0xff]
    %v440 = vld [vmem:[#allocation9 + $0x60] sm:$0xff]
    %v441 = vld [vmem:[#allocation9 + $0x68] sm:$0xff]
    %v442 = vld [vmem:[#allocation9 + $0x70] sm:$0xff]
    %v443 = vld [vmem:[#allocation9 + $0x78] sm:$0xff]
    %444 = vmatpush.msra.mxu0 %v443
    %445 = vmatpush.msra.mxu0 %v442
    %446 = vmatpush.msra.mxu0 %v441
    %447 = vmatpush.msra.mxu0 %v440
    %448 = vmatpush.msra.mxu0 %v439
    %449 = vmatpush.msra.mxu0 %v438
    %450 = vmatpush.msra.mxu0 %v437
    %451 = vmatpush.msra.mxu0 %v436
    %452 = vmatpush.msra.mxu0 %v435
    %453 = vmatpush.msra.mxu0 %v434
    %454 = vmatpush.msra.mxu0 %v433
    %455 = vmatpush.msra.mxu0 %v432
    %456 = vmatpush.msra.mxu0 %v431
    %457 = vmatpush.msra.mxu0 %v430
    %458 = vmatpush.msra.mxu0 %v429
    %459 = vmatpush.msra.mxu0 %v428
    %460 = vmatmul.f32.gmra.mxu0 %v347
    %v461 = vpop.f32.mrf.mxu0
    %v462 = vadd.f32 0.0, %v461
    %463 = vdwg.mxu0
    %v464 = vadd.f32 %v426, %v462
    %v465 = vtanh.pop %v464
    %466 = vst [vmem:[#allocation3 + $0x2] sm:$0x3] %v465
    %v467 = vld [vmem:[#allocation2 + $0x6] sm:$0x3]
    %v468 = vld [vmem:[#allocation6] sm:$0xff]
    %v469 = vld [vmem:[#allocation6 + $0x8] sm:$0xff]
    %v470 = vld [vmem:[#allocation6 + $0x10] sm:$0xff]
    %v471 = vld [vmem:[#allocation6 + $0x18] sm:$0xff]
    %v472 = vld [vmem:[#allocation6 + $0x20] sm:$0xff]
    %v473 = vld [vmem:[#allocation6 + $0x28] sm:$0xff]
    %v474 = vld [vmem:[#allocation6 + $0x30] sm:$0xff]
    %v475 = vld [vmem:[#allocation6 + $0x38] sm:$0xff]
    %v476 = vld [vmem:[#allocation6 + $0x40] sm:$0xff]
    %v477 = vld [vmem:[#allocation6 + $0x48] sm:$0xff]
    %v478 = vld [vmem:[#allocation6 + $0x50] sm:$0xff]
    %v479 = vld [vmem:[#allocation6 + $0x58] sm:$0xff]
    %v480 = vld [vmem:[#allocation6 + $0x60] sm:$0xff]
    %v481 = vld [vmem:[#allocation6 + $0x68] sm:$0xff]
    %v482 = vld [vmem:[#allocation6 + $0x70] sm:$0xff]
    %v483 = vld [vmem:[#allocation6 + $0x78] sm:$0xff]
    %484 = vmatpush.msra.mxu0 %v483
    %485 = vmatpush.msra.mxu0 %v482
    %486 = vmatpush.msra.mxu0 %v481
    %487 = vmatpush.msra.mxu0 %v480
    %488 = vmatpush.msra.mxu0 %v479
    %489 = vmatpush.msra.mxu0 %v478
    %490 = vmatpush.msra.mxu0 %v477
    %491 = vmatpush.msra.mxu0 %v476
    %492 = vmatpush.msra.mxu0 %v475
    %493 = vmatpush.msra.mxu0 %v474
    %494 = vmatpush.msra.mxu0 %v473
    %495 = vmatpush.msra.mxu0 %v472
    %496 = vmatpush.msra.mxu0 %v471
    %497 = vmatpush.msra.mxu0 %v470
    %498 = vmatpush.msra.mxu0 %v469
    %499 = vmatpush.msra.mxu0 %v468
    %500 = vmatmul.f32.gmra.mxu0 %v387
    %v501 = vpop.f32.mrf.mxu0
    %v502 = vadd.f32 0.0, %v501
    %503 = vdwg.mxu0
    %v504 = vadd.f32 %v467, %v502
    %v505 = vtanh.pop %v504
    %v506 = vld [vmem:[#allocation8] sm:$0xff]
    %v507 = vld [vmem:[#allocation8 + $0x8] sm:$0xff]
    %v508 = vld [vmem:[#allocation8 + $0x10] sm:$0xff]
    %v509 = vld [vmem:[#allocation8 + $0x18] sm:$0xff]
    %v510 = vld [vmem:[#allocation8 + $0x20] sm:$0xff]
    %v511 = vld [vmem:[#allocation8 + $0x28] sm:$0xff]
    %v512 = vld [vmem:[#allocation8 + $0x30] sm:$0xff]
    %v513 = vld [vmem:[#allocation8 + $0x38] sm:$0xff]
    %v514 = vld [vmem:[#allocation8 + $0x40] sm:$0xff]
    %v515 = vld [vmem:[#allocation8 + $0x48] sm:$0xff]
    %v516 = vld [vmem:[#allocation8 + $0x50] sm:$0xff]
    %v517 = vld [vmem:[#allocation8 + $0x58] sm:$0xff]
    %v518 = vld [vmem:[#allocation8 + $0x60] sm:$0xff]
    %v519 = vld [vmem:[#allocation8 + $0x68] sm:$0xff]
    %v520 = vld [vmem:[#allocation8 + $0x70] sm:$0xff]
    %v521 = vld [vmem:[#allocation8 + $0x78] sm:$0xff]
    %v522 = vld [vmem:[%s7] sm:$0x1]
    %v524 = vperm.slane %v522, 0
    %526 = vmatpush.msra.mxu0 %v521
    %527 = vmatpush.msra.mxu0 %v520
    %528 = vmatpush.msra.mxu0 %v519
    %529 = vmatpush.msra.mxu0 %v518
    %530 = vmatpush.msra.mxu0 %v517
    %531 = vmatpush.msra.mxu0 %v516
    %532 = vmatpush.msra.mxu0 %v515
    %533 = vmatpush.msra.mxu0 %v514
    %534 = vmatpush.msra.mxu0 %v513
    %535 = vmatpush.msra.mxu0 %v512
    %536 = vmatpush.msra.mxu0 %v511
    %537 = vmatpush.msra.mxu0 %v510
    %538 = vmatpush.msra.mxu0 %v509
    %539 = vmatpush.msra.mxu0 %v508
    %540 = vmatpush.msra.mxu0 %v507
    %541 = vmatpush.msra.mxu0 %v506
    %542 = vmatmul.f32.gmra.mxu0 %v387
    %v543 = vpop.f32.mrf.mxu0
    %v544 = vadd.f32 %v524, %v543
    %545 = vdwg.mxu0
    %v546 = vld [vmem:[#allocation9] sm:$0xff]
    %v547 = vld [vmem:[#allocation9 + $0x8] sm:$0xff]
    %v548 = vld [vmem:[#allocation9 + $0x10] sm:$0xff]
    %v549 = vld [vmem:[#allocation9 + $0x18] sm:$0xff]
    %v550 = vld [vmem:[#allocation9 + $0x20] sm:$0xff]
    %v551 = vld [vmem:[#allocation9 + $0x28] sm:$0xff]
    %v552 = vld [vmem:[#allocation9 + $0x30] sm:$0xff]
    %v553 = vld [vmem:[#allocation9 + $0x38] sm:$0xff]
    %v554 = vld [vmem:[#allocation9 + $0x40] sm:$0xff]
    %v555 = vld [vmem:[#allocation9 + $0x48] sm:$0xff]
    %v556 = vld [vmem:[#allocation9 + $0x50] sm:$0xff]
    %v557 = vld [vmem:[#allocation9 + $0x58] sm:$0xff]
    %v558 = vld [vmem:[#allocation9 + $0x60] sm:$0xff]
    %v559 = vld [vmem:[#allocation9 + $0x68] sm:$0xff]
    %v560 = vld [vmem:[#allocation9 + $0x70] sm:$0xff]
    %v561 = vld [vmem:[#allocation9 + $0x78] sm:$0xff]
    %562 = vmatpush.msra.mxu0 %v561
    %563 = vmatpush.msra.mxu0 %v560
    %564 = vmatpush.msra.mxu0 %v559
    %565 = vmatpush.msra.mxu0 %v558
    %566 = vmatpush.msra.mxu0 %v557
    %567 = vmatpush.msra.mxu0 %v556
    %568 = vmatpush.msra.mxu0 %v555
    %569 = vmatpush.msra.mxu0 %v554
    %570 = vmatpush.msra.mxu0 %v553
    %571 = vmatpush.msra.mxu0 %v552
    %572 = vmatpush.msra.mxu0 %v551
    %573 = vmatpush.msra.mxu0 %v550
    %574 = vmatpush.msra.mxu0 %v549
    %575 = vmatpush.msra.mxu0 %v548
    %576 = vmatpush.msra.mxu0 %v547
    %577 = vmatpush.msra.mxu0 %v546
    %578 = vmatmul.f32.gmra.mxu0 %v465
    %v579 = vpop.f32.mrf.mxu0
    %v580 = vadd.f32 0.0, %v579
    %581 = vdwg.mxu0
    %v582 = vadd.f32 %v544, %v580
    %v583 = vtanh.pop %v582
    %584 = vst [vmem:[#allocation3 + $0x4] sm:$0x3] %v583
    %v585 = vld [vmem:[#allocation2 + $0x8] sm:$0x3]
    %v586 = vld [vmem:[#allocation6] sm:$0xff]
    %v587 = vld [vmem:[#allocation6 + $0x8] sm:$0xff]
    %v588 = vld [vmem:[#allocation6 + $0x10] sm:$0xff]
    %v589 = vld [vmem:[#allocation6 + $0x18] sm:$0xff]
    %v590 = vld [vmem:[#allocation6 + $0x20] sm:$0xff]
    %v591 = vld [vmem:[#allocation6 + $0x28] sm:$0xff]
    %v592 = vld [vmem:[#allocation6 + $0x30] sm:$0xff]
    %v593 = vld [vmem:[#allocation6 + $0x38] sm:$0xff]
    %v594 = vld [vmem:[#allocation6 + $0x40] sm:$0xff]
    %v595 = vld [vmem:[#allocation6 + $0x48] sm:$0xff]
    %v596 = vld [vmem:[#allocation6 + $0x50] sm:$0xff]
    %v597 = vld [vmem:[#allocation6 + $0x58] sm:$0xff]
    %v598 = vld [vmem:[#allocation6 + $0x60] sm:$0xff]
    %v599 = vld [vmem:[#allocation6 + $0x68] sm:$0xff]
    %v600 = vld [vmem:[#allocation6 + $0x70] sm:$0xff]
    %v601 = vld [vmem:[#allocation6 + $0x78] sm:$0xff]
    %602 = vmatpush.msra.mxu0 %v601
    %603 = vmatpush.msra.mxu0 %v600
    %604 = vmatpush.msra.mxu0 %v599
    %605 = vmatpush.msra.mxu0 %v598
    %606 = vmatpush.msra.mxu0 %v597
    %607 = vmatpush.msra.mxu0 %v596
    %608 = vmatpush.msra.mxu0 %v595
    %609 = vmatpush.msra.mxu0 %v594
    %610 = vmatpush.msra.mxu0 %v593
    %611 = vmatpush.msra.mxu0 %v592
    %612 = vmatpush.msra.mxu0 %v591
    %613 = vmatpush.msra.mxu0 %v590
    %614 = vmatpush.msra.mxu0 %v589
    %615 = vmatpush.msra.mxu0 %v588
    %616 = vmatpush.msra.mxu0 %v587
    %617 = vmatpush.msra.mxu0 %v586
    %618 = vmatmul.f32.gmra.mxu0 %v505
    %v619 = vpop.f32.mrf.mxu0
    %v620 = vadd.f32 0.0, %v619
    %621 = vdwg.mxu0
    %v622 = vadd.f32 %v585, %v620
    %v623 = vtanh.pop %v622
    %v624 = vld [vmem:[#allocation8] sm:$0xff]
    %v625 = vld [vmem:[#allocation8 + $0x8] sm:$0xff]
    %v626 = vld [vmem:[#allocation8 + $0x10] sm:$0xff]
    %v627 = vld [vmem:[#allocation8 + $0x18] sm:$0xff]
    %v628 = vld [vmem:[#allocation8 + $0x20] sm:$0xff]
    %v629 = vld [vmem:[#allocation8 + $0x28] sm:$0xff]
    %v630 = vld [vmem:[#allocation8 + $0x30] sm:$0xff]
    %v631 = vld [vmem:[#allocation8 + $0x38] sm:$0xff]
    %v632 = vld [vmem:[#allocation8 + $0x40] sm:$0xff]
    %v633 = vld [vmem:[#allocation8 + $0x48] sm:$0xff]
    %v634 = vld [vmem:[#allocation8 + $0x50] sm:$0xff]
    %v635 = vld [vmem:[#allocation8 + $0x58] sm:$0xff]
    %v636 = vld [vmem:[#allocation8 + $0x60] sm:$0xff]
    %v637 = vld [vmem:[#allocation8 + $0x68] sm:$0xff]
    %v638 = vld [vmem:[#allocation8 + $0x70] sm:$0xff]
    %v639 = vld [vmem:[#allocation8 + $0x78] sm:$0xff]
    %v640 = vld [vmem:[%s7] sm:$0x1]
    %v642 = vperm.slane %v640, 0
    %644 = vmatpush.msra.mxu0 %v639
    %645 = vmatpush.msra.mxu0 %v638
    %646 = vmatpush.msra.mxu0 %v637
    %647 = vmatpush.msra.mxu0 %v636
    %648 = vmatpush.msra.mxu0 %v635
    %649 = vmatpush.msra.mxu0 %v634
    %650 = vmatpush.msra.mxu0 %v633
    %651 = vmatpush.msra.mxu0 %v632
    %652 = vmatpush.msra.mxu0 %v631
    %653 = vmatpush.msra.mxu0 %v630
    %654 = vmatpush.msra.mxu0 %v629
    %655 = vmatpush.msra.mxu0 %v628
    %656 = vmatpush.msra.mxu0 %v627
    %657 = vmatpush.msra.mxu0 %v626
    %658 = vmatpush.msra.mxu0 %v625
    %659 = vmatpush.msra.mxu0 %v624
    %660 = vmatmul.f32.gmra.mxu0 %v505
    %v661 = vpop.f32.mrf.mxu0
    %v662 = vadd.f32 %v642, %v661
    %663 = vdwg.mxu0
    %v664 = vld [vmem:[#allocation9] sm:$0xff]
    %v665 = vld [vmem:[#allocation9 + $0x8] sm:$0xff]
    %v666 = vld [vmem:[#allocation9 + $0x10] sm:$0xff]
    %v667 = vld [vmem:[#allocation9 + $0x18] sm:$0xff]
    %v668 = vld [vmem:[#allocation9 + $0x20] sm:$0xff]
    %v669 = vld [vmem:[#allocation9 + $0x28] sm:$0xff]
    %v670 = vld [vmem:[#allocation9 + $0x30] sm:$0xff]
    %v671 = vld [vmem:[#allocation9 + $0x38] sm:$0xff]
    %v672 = vld [vmem:[#allocation9 + $0x40] sm:$0xff]
    %v673 = vld [vmem:[#allocation9 + $0x48] sm:$0xff]
    %v674 = vld [vmem:[#allocation9 + $0x50] sm:$0xff]
    %v675 = vld [vmem:[#allocation9 + $0x58] sm:$0xff]
    %v676 = vld [vmem:[#allocation9 + $0x60] sm:$0xff]
    %v677 = vld [vmem:[#allocation9 + $0x68] sm:$0xff]
    %v678 = vld [vmem:[#allocation9 + $0x70] sm:$0xff]
    %v679 = vld [vmem:[#allocation9 + $0x78] sm:$0xff]
    %680 = vmatpush.msra.mxu0 %v679
    %681 = vmatpush.msra.mxu0 %v678
    %682 = vmatpush.msra.mxu0 %v677
    %683 = vmatpush.msra.mxu0 %v676
    %684 = vmatpush.msra.mxu0 %v675
    %685 = vmatpush.msra.mxu0 %v674
    %686 = vmatpush.msra.mxu0 %v673
    %687 = vmatpush.msra.mxu0 %v672
    %688 = vmatpush.msra.mxu0 %v671
    %689 = vmatpush.msra.mxu0 %v670
    %690 = vmatpush.msra.mxu0 %v669
    %691 = vmatpush.msra.mxu0 %v668
    %692 = vmatpush.msra.mxu0 %v667
    %693 = vmatpush.msra.mxu0 %v666
    %694 = vmatpush.msra.mxu0 %v665
    %695 = vmatpush.msra.mxu0 %v664
    %696 = vmatmul.f32.gmra.mxu0 %v583
    %v697 = vpop.f32.mrf.mxu0
    %v698 = vadd.f32 0.0, %v697
    %699 = vdwg.mxu0
    %v700 = vadd.f32 %v662, %v698
    %v701 = vtanh.pop %v700
    %702 = vst [vmem:[#allocation3 + $0x6] sm:$0x3] %v701
    %v703 = vld [vmem:[#allocation2 + $0xa] sm:$0x3]
    %v704 = vld [vmem:[#allocation6] sm:$0xff]
    %v705 = vld [vmem:[#allocation6 + $0x8] sm:$0xff]
    %v706 = vld [vmem:[#allocation6 + $0x10] sm:$0xff]
    %v707 = vld [vmem:[#allocation6 + $0x18] sm:$0xff]
    %v708 = vld [vmem:[#allocation6 + $0x20] sm:$0xff]
    %v709 = vld [vmem:[#allocation6 + $0x28] sm:$0xff]
    %v710 = vld [vmem:[#allocation6 + $0x30] sm:$0xff]
    %v711 = vld [vmem:[#allocation6 + $0x38] sm:$0xff]
    %v712 = vld [vmem:[#allocation6 + $0x40] sm:$0xff]
    %v713 = vld [vmem:[#allocation6 + $0x48] sm:$0xff]
    %v714 = vld [vmem:[#allocation6 + $0x50] sm:$0xff]
    %v715 = vld [vmem:[#allocation6 + $0x58] sm:$0xff]
    %v716 = vld [vmem:[#allocation6 + $0x60] sm:$0xff]
    %v717 = vld [vmem:[#allocation6 + $0x68] sm:$0xff]
    %v718 = vld [vmem:[#allocation6 + $0x70] sm:$0xff]
    %v719 = vld [vmem:[#allocation6 + $0x78] sm:$0xff]
    %720 = vmatpush.msra.mxu0 %v719
    %721 = vmatpush.msra.mxu0 %v718
    %722 = vmatpush.msra.mxu0 %v717
    %723 = vmatpush.msra.mxu0 %v716
    %724 = vmatpush.msra.mxu0 %v715
    %725 = vmatpush.msra.mxu0 %v714
    %726 = vmatpush.msra.mxu0 %v713
    %727 = vmatpush.msra.mxu0 %v712
    %728 = vmatpush.msra.mxu0 %v711
    %729 = vmatpush.msra.mxu0 %v710
    %730 = vmatpush.msra.mxu0 %v709
    %731 = vmatpush.msra.mxu0 %v708
    %732 = vmatpush.msra.mxu0 %v707
    %733 = vmatpush.msra.mxu0 %v706
    %734 = vmatpush.msra.mxu0 %v705
    %735 = vmatpush.msra.mxu0 %v704
    %736 = vmatmul.f32.gmra.mxu0 %v623
    %v737 = vpop.f32.mrf.mxu0
    %v738 = vadd.f32 0.0, %v737
    %739 = vdwg.mxu0
    %v740 = vadd.f32 %v703, %v738
    %v741 = vtanh.pop %v740
    %v742 = vld [vmem:[#allocation8] sm:$0xff]
    %v743 = vld [vmem:[#allocation8 + $0x8] sm:$0xff]
    %v744 = vld [vmem:[#allocation8 + $0x10] sm:$0xff]
    %v745 = vld [vmem:[#allocation8 + $0x18] sm:$0xff]
    %v746 = vld [vmem:[#allocation8 + $0x20] sm:$0xff]
    %v747 = vld [vmem:[#allocation8 + $0x28] sm:$0xff]
    %v748 = vld [vmem:[#allocation8 + $0x30] sm:$0xff]
    %v749 = vld [vmem:[#allocation8 + $0x38] sm:$0xff]
    %v750 = vld [vmem:[#allocation8 + $0x40] sm:$0xff]
    %v751 = vld [vmem:[#allocation8 + $0x48] sm:$0xff]
    %v752 = vld [vmem:[#allocation8 + $0x50] sm:$0xff]
    %v753 = vld [vmem:[#allocation8 + $0x58] sm:$0xff]
    %v754 = vld [vmem:[#allocation8 + $0x60] sm:$0xff]
    %v755 = vld [vmem:[#allocation8 + $0x68] sm:$0xff]
    %v756 = vld [vmem:[#allocation8 + $0x70] sm:$0xff]
    %v757 = vld [vmem:[#allocation8 + $0x78] sm:$0xff]
    %v758 = vld [vmem:[%s7] sm:$0x1]
    %v760 = vperm.slane %v758, 0
    %762 = vmatpush.msra.mxu0 %v757
    %763 = vmatpush.msra.mxu0 %v756
    %764 = vmatpush.msra.mxu0 %v755
    %765 = vmatpush.msra.mxu0 %v754
    %766 = vmatpush.msra.mxu0 %v753
    %767 = vmatpush.msra.mxu0 %v752
    %768 = vmatpush.msra.mxu0 %v751
    %769 = vmatpush.msra.mxu0 %v750
    %770 = vmatpush.msra.mxu0 %v749
    %771 = vmatpush.msra.mxu0 %v748
    %772 = vmatpush.msra.mxu0 %v747
    %773 = vmatpush.msra.mxu0 %v746
    %774 = vmatpush.msra.mxu0 %v745
    %775 = vmatpush.msra.mxu0 %v744
    %776 = vmatpush.msra.mxu0 %v743
    %777 = vmatpush.msra.mxu0 %v742
    %778 = vmatmul.f32.gmra.mxu0 %v623
    %v779 = vpop.f32.mrf.mxu0
    %v780 = vadd.f32 %v760, %v779
    %781 = vdwg.mxu0
    %v782 = vld [vmem:[#allocation9] sm:$0xff]
    %v783 = vld [vmem:[#allocation9 + $0x8] sm:$0xff]
    %v784 = vld [vmem:[#allocation9 + $0x10] sm:$0xff]
    %v785 = vld [vmem:[#allocation9 + $0x18] sm:$0xff]
    %v786 = vld [vmem:[#allocation9 + $0x20] sm:$0xff]
    %v787 = vld [vmem:[#allocation9 + $0x28] sm:$0xff]
    %v788 = vld [vmem:[#allocation9 + $0x30] sm:$0xff]
    %v789 = vld [vmem:[#allocation9 + $0x38] sm:$0xff]
    %v790 = vld [vmem:[#allocation9 + $0x40] sm:$0xff]
    %v791 = vld [vmem:[#allocation9 + $0x48] sm:$0xff]
    %v792 = vld [vmem:[#allocation9 + $0x50] sm:$0xff]
    %v793 = vld [vmem:[#allocation9 + $0x58] sm:$0xff]
    %v794 = vld [vmem:[#allocation9 + $0x60] sm:$0xff]
    %v795 = vld [vmem:[#allocation9 + $0x68] sm:$0xff]
    %v796 = vld [vmem:[#allocation9 + $0x70] sm:$0xff]
    %v797 = vld [vmem:[#allocation9 + $0x78] sm:$0xff]
    %798 = vmatpush.msra.mxu0 %v797
    %799 = vmatpush.msra.mxu0 %v796
    %800 = vmatpush.msra.mxu0 %v795
    %801 = vmatpush.msra.mxu0 %v794
    %802 = vmatpush.msra.mxu0 %v793
    %803 = vmatpush.msra.mxu0 %v792
    %804 = vmatpush.msra.mxu0 %v791
    %805 = vmatpush.msra.mxu0 %v790
    %806 = vmatpush.msra.mxu0 %v789
    %807 = vmatpush.msra.mxu0 %v788
    %808 = vmatpush.msra.mxu0 %v787
    %809 = vmatpush.msra.mxu0 %v786
    %810 = vmatpush.msra.mxu0 %v785
    %811 = vmatpush.msra.mxu0 %v784
    %812 = vmatpush.msra.mxu0 %v783
    %813 = vmatpush.msra.mxu0 %v782
    %814 = vmatmul.f32.gmra.mxu0 %v701
    %v815 = vpop.f32.mrf.mxu0
    %v816 = vadd.f32 0.0, %v815
    %817 = vdwg.mxu0
    %v818 = vadd.f32 %v780, %v816
    %v819 = vtanh.pop %v818
    %820 = vst [vmem:[#allocation3 + $0x8] sm:$0x3] %v819
    %v821 = vld [vmem:[#allocation2 + $0xc] sm:$0x3]
    %v822 = vld [vmem:[#allocation6] sm:$0xff]
    %v823 = vld [vmem:[#allocation6 + $0x8] sm:$0xff]
    %v824 = vld [vmem:[#allocation6 + $0x10] sm:$0xff]
    %v825 = vld [vmem:[#allocation6 + $0x18] sm:$0xff]
    %v826 = vld [vmem:[#allocation6 + $0x20] sm:$0xff]
    %v827 = vld [vmem:[#allocation6 + $0x28] sm:$0xff]
    %v828 = vld [vmem:[#allocation6 + $0x30] sm:$0xff]
    %v829 = vld [vmem:[#allocation6 + $0x38] sm:$0xff]
    %v830 = vld [vmem:[#allocation6 + $0x40] sm:$0xff]
    %v831 = vld [vmem:[#allocation6 + $0x48] sm:$0xff]
    %v832 = vld [vmem:[#allocation6 + $0x50] sm:$0xff]
    %v833 = vld [vmem:[#allocation6 + $0x58] sm:$0xff]
    %v834 = vld [vmem:[#allocation6 + $0x60] sm:$0xff]
    %v835 = vld [vmem:[#allocation6 + $0x68] sm:$0xff]
    %v836 = vld [vmem:[#allocation6 + $0x70] sm:$0xff]
    %v837 = vld [vmem:[#allocation6 + $0x78] sm:$0xff]
    %838 = vmatpush.msra.mxu0 %v837
    %839 = vmatpush.msra.mxu0 %v836
    %840 = vmatpush.msra.mxu0 %v835
    %841 = vmatpush.msra.mxu0 %v834
    %842 = vmatpush.msra.mxu0 %v833
    %843 = vmatpush.msra.mxu0 %v832
    %844 = vmatpush.msra.mxu0 %v831
    %845 = vmatpush.msra.mxu0 %v830
    %846 = vmatpush.msra.mxu0 %v829
    %847 = vmatpush.msra.mxu0 %v828
    %848 = vmatpush.msra.mxu0 %v827
    %849 = vmatpush.msra.mxu0 %v826
    %850 = vmatpush.msra.mxu0 %v825
    %851 = vmatpush.msra.mxu0 %v824
    %852 = vmatpush.msra.mxu0 %v823
    %853 = vmatpush.msra.mxu0 %v822
    %854 = vmatmul.f32.gmra.mxu0 %v741
    %v855 = vpop.f32.mrf.mxu0
    %v856 = vadd.f32 0.0, %v855
    %857 = vdwg.mxu0
    %v858 = vadd.f32 %v821, %v856
    %v859 = vtanh.pop %v858
    %v860 = vld [vmem:[#allocation8] sm:$0xff]
    %v861 = vld [vmem:[#allocation8 + $0x8] sm:$0xff]
    %v862 = vld [vmem:[#allocation8 + $0x10] sm:$0xff]
    %v863 = vld [vmem:[#allocation8 + $0x18] sm:$0xff]
    %v864 = vld [vmem:[#allocation8 + $0x20] sm:$0xff]
    %v865 = vld [vmem:[#allocation8 + $0x28] sm:$0xff]
    %v866 = vld [vmem:[#allocation8 + $0x30] sm:$0xff]
    %v867 = vld [vmem:[#allocation8 + $0x38] sm:$0xff]
    %v868 = vld [vmem:[#allocation8 + $0x40] sm:$0xff]
    %v869 = vld [vmem:[#allocation8 + $0x48] sm:$0xff]
    %v870 = vld [vmem:[#allocation8 + $0x50] sm:$0xff]
    %v871 = vld [vmem:[#allocation8 + $0x58] sm:$0xff]
    %v872 = vld [vmem:[#allocation8 + $0x60] sm:$0xff]
    %v873 = vld [vmem:[#allocation8 + $0x68] sm:$0xff]
    %v874 = vld [vmem:[#allocation8 + $0x70] sm:$0xff]
    %v875 = vld [vmem:[#allocation8 + $0x78] sm:$0xff]
    %v876 = vld [vmem:[%s7] sm:$0x1]
    %v878 = vperm.slane %v876, 0
    %880 = vmatpush.msra.mxu0 %v875
    %881 = vmatpush.msra.mxu0 %v874
    %882 = vmatpush.msra.mxu0 %v873
    %883 = vmatpush.msra.mxu0 %v872
    %884 = vmatpush.msra.mxu0 %v871
    %885 = vmatpush.msra.mxu0 %v870
    %886 = vmatpush.msra.mxu0 %v869
    %887 = vmatpush.msra.mxu0 %v868
    %888 = vmatpush.msra.mxu0 %v867
    %889 = vmatpush.msra.mxu0 %v866
    %890 = vmatpush.msra.mxu0 %v865
    %891 = vmatpush.msra.mxu0 %v864
    %892 = vmatpush.msra.mxu0 %v863
    %893 = vmatpush.msra.mxu0 %v862
    %894 = vmatpush.msra.mxu0 %v861
    %895 = vmatpush.msra.mxu0 %v860
    %896 = vmatmul.f32.gmra.mxu0 %v741
    %v897 = vpop.f32.mrf.mxu0
    %v898 = vadd.f32 %v878, %v897
    %899 = vdwg.mxu0
    %v900 = vld [vmem:[#allocation9] sm:$0xff]
    %v901 = vld [vmem:[#allocation9 + $0x8] sm:$0xff]
    %v902 = vld [vmem:[#allocation9 + $0x10] sm:$0xff]
    %v903 = vld [vmem:[#allocation9 + $0x18] sm:$0xff]
    %v904 = vld [vmem:[#allocation9 + $0x20] sm:$0xff]
    %v905 = vld [vmem:[#allocation9 + $0x28] sm:$0xff]
    %v906 = vld [vmem:[#allocation9 + $0x30] sm:$0xff]
    %v907 = vld [vmem:[#allocation9 + $0x38] sm:$0xff]
    %v908 = vld [vmem:[#allocation9 + $0x40] sm:$0xff]
    %v909 = vld [vmem:[#allocation9 + $0x48] sm:$0xff]
    %v910 = vld [vmem:[#allocation9 + $0x50] sm:$0xff]
    %v911 = vld [vmem:[#allocation9 + $0x58] sm:$0xff]
    %v912 = vld [vmem:[#allocation9 + $0x60] sm:$0xff]
    %v913 = vld [vmem:[#allocation9 + $0x68] sm:$0xff]
    %v914 = vld [vmem:[#allocation9 + $0x70] sm:$0xff]
    %v915 = vld [vmem:[#allocation9 + $0x78] sm:$0xff]
    %916 = vmatpush.msra.mxu0 %v915
    %917 = vmatpush.msra.mxu0 %v914
    %918 = vmatpush.msra.mxu0 %v913
    %919 = vmatpush.msra.mxu0 %v912
    %920 = vmatpush.msra.mxu0 %v911
    %921 = vmatpush.msra.mxu0 %v910
    %922 = vmatpush.msra.mxu0 %v909
    %923 = vmatpush.msra.mxu0 %v908
    %924 = vmatpush.msra.mxu0 %v907
    %925 = vmatpush.msra.mxu0 %v906
    %926 = vmatpush.msra.mxu0 %v905
    %927 = vmatpush.msra.mxu0 %v904
    %928 = vmatpush.msra.mxu0 %v903
    %929 = vmatpush.msra.mxu0 %v902
    %930 = vmatpush.msra.mxu0 %v901
    %931 = vmatpush.msra.mxu0 %v900
    %932 = vmatmul.f32.gmra.mxu0 %v819
    %v933 = vpop.f32.mrf.mxu0
    %v934 = vadd.f32 0.0, %v933
    %935 = vdwg.mxu0
    %v936 = vadd.f32 %v898, %v934
    %v937 = vtanh.pop %v936
    %938 = vst [vmem:[#allocation3 + $0xa] sm:$0x3] %v937
    %v939 = vld [vmem:[#allocation2 + $0xe] sm:$0x3]
    %v940 = vld [vmem:[#allocation6] sm:$0xff]
    %v941 = vld [vmem:[#allocation6 + $0x8] sm:$0xff]
    %v942 = vld [vmem:[#allocation6 + $0x10] sm:$0xff]
    %v943 = vld [vmem:[#allocation6 + $0x18] sm:$0xff]
    %v944 = vld [vmem:[#allocation6 + $0x20] sm:$0xff]
    %v945 = vld [vmem:[#allocation6 + $0x28] sm:$0xff]
    %v946 = vld [vmem:[#allocation6 + $0x30] sm:$0xff]
    %v947 = vld [vmem:[#allocation6 + $0x38] sm:$0xff]
    %v948 = vld [vmem:[#allocation6 + $0x40] sm:$0xff]
    %v949 = vld [vmem:[#allocation6 + $0x48] sm:$0xff]
    %v950 = vld [vmem:[#allocation6 + $0x50] sm:$0xff]
    %v951 = vld [vmem:[#allocation6 + $0x58] sm:$0xff]
    %v952 = vld [vmem:[#allocation6 + $0x60] sm:$0xff]
    %v953 = vld [vmem:[#allocation6 + $0x68] sm:$0xff]
    %v954 = vld [vmem:[#allocation6 + $0x70] sm:$0xff]
    %v955 = vld [vmem:[#allocation6 + $0x78] sm:$0xff]
    %956 = vmatpush.msra.mxu0 %v955
    %957 = vmatpush.msra.mxu0 %v954
    %958 = vmatpush.msra.mxu0 %v953
    %959 = vmatpush.msra.mxu0 %v952
    %960 = vmatpush.msra.mxu0 %v951
    %961 = vmatpush.msra.mxu0 %v950
    %962 = vmatpush.msra.mxu0 %v949
    %963 = vmatpush.msra.mxu0 %v948
    %964 = vmatpush.msra.mxu0 %v947
    %965 = vmatpush.msra.mxu0 %v946
    %966 = vmatpush.msra.mxu0 %v945
    %967 = vmatpush.msra.mxu0 %v944
    %968 = vmatpush.msra.mxu0 %v943
    %969 = vmatpush.msra.mxu0 %v942
    %970 = vmatpush.msra.mxu0 %v941
    %971 = vmatpush.msra.mxu0 %v940
    %972 = vmatmul.f32.gmra.mxu0 %v859
    %v973 = vpop.f32.mrf.mxu0
    %v974 = vadd.f32 0.0, %v973
    %975 = vdwg.mxu0
    %v976 = vadd.f32 %v939, %v974
    %v977 = vtanh.pop %v976
    %v978 = vld [vmem:[#allocation8] sm:$0xff]
    %v979 = vld [vmem:[#allocation8 + $0x8] sm:$0xff]
    %v980 = vld [vmem:[#allocation8 + $0x10] sm:$0xff]
    %v981 = vld [vmem:[#allocation8 + $0x18] sm:$0xff]
    %v982 = vld [vmem:[#allocation8 + $0x20] sm:$0xff]
    %v983 = vld [vmem:[#allocation8 + $0x28] sm:$0xff]
    %v984 = vld [vmem:[#allocation8 + $0x30] sm:$0xff]
    %v985 = vld [vmem:[#allocation8 + $0x38] sm:$0xff]
    %v986 = vld [vmem:[#allocation8 + $0x40] sm:$0xff]
    %v987 = vld [vmem:[#allocation8 + $0x48] sm:$0xff]
    %v988 = vld [vmem:[#allocation8 + $0x50] sm:$0xff]
    %v989 = vld [vmem:[#allocation8 + $0x58] sm:$0xff]
    %v990 = vld [vmem:[#allocation8 + $0x60] sm:$0xff]
    %v991 = vld [vmem:[#allocation8 + $0x68] sm:$0xff]
    %v992 = vld [vmem:[#allocation8 + $0x70] sm:$0xff]
    %v993 = vld [vmem:[#allocation8 + $0x78] sm:$0xff]
    %v994 = vld [vmem:[%s7] sm:$0x1]
    %v996 = vperm.slane %v994, 0
    %998 = vmatpush.msra.mxu0 %v993
    %999 = vmatpush.msra.mxu0 %v992
    %1000 = vmatpush.msra.mxu0 %v991
    %1001 = vmatpush.msra.mxu0 %v990
    %1002 = vmatpush.msra.mxu0 %v989
    %1003 = vmatpush.msra.mxu0 %v988
    %1004 = vmatpush.msra.mxu0 %v987
    %1005 = vmatpush.msra.mxu0 %v986
    %1006 = vmatpush.msra.mxu0 %v985
    %1007 = vmatpush.msra.mxu0 %v984
    %1008 = vmatpush.msra.mxu0 %v983
    %1009 = vmatpush.msra.mxu0 %v982
    %1010 = vmatpush.msra.mxu0 %v981
    %1011 = vmatpush.msra.mxu0 %v980
    %1012 = vmatpush.msra.mxu0 %v979
    %1013 = vmatpush.msra.mxu0 %v978
    %1014 = vmatmul.f32.gmra.mxu0 %v859
    %v1015 = vpop.f32.mrf.mxu0
    %v1016 = vadd.f32 %v996, %v1015
    %1017 = vdwg.mxu0
    %v1018 = vld [vmem:[#allocation9] sm:$0xff]
    %v1019 = vld [vmem:[#allocation9 + $0x8] sm:$0xff]
    %v1020 = vld [vmem:[#allocation9 + $0x10] sm:$0xff]
    %v1021 = vld [vmem:[#allocation9 + $0x18] sm:$0xff]
    %v1022 = vld [vmem:[#allocation9 + $0x20] sm:$0xff]
    %v1023 = vld [vmem:[#allocation9 + $0x28] sm:$0xff]
    %v1024 = vld [vmem:[#allocation9 + $0x30] sm:$0xff]
    %v1025 = vld [vmem:[#allocation9 + $0x38] sm:$0xff]
    %v1026 = vld [vmem:[#allocation9 + $0x40] sm:$0xff]
    %v1027 = vld [vmem:[#allocation9 + $0x48] sm:$0xff]
    %v1028 = vld [vmem:[#allocation9 + $0x50] sm:$0xff]
    %v1029 = vld [vmem:[#allocation9 + $0x58] sm:$0xff]
    %v1030 = vld [vmem:[#allocation9 + $0x60] sm:$0xff]
    %v1031 = vld [vmem:[#allocation9 + $0x68] sm:$0xff]
    %v1032 = vld [vmem:[#allocation9 + $0x70] sm:$0xff]
    %v1033 = vld [vmem:[#allocation9 + $0x78] sm:$0xff]
    %1034 = vmatpush.msra.mxu0 %v1033
    %1035 = vmatpush.msra.mxu0 %v1032
    %1036 = vmatpush.msra.mxu0 %v1031
    %1037 = vmatpush.msra.mxu0 %v1030
    %1038 = vmatpush.msra.mxu0 %v1029
    %1039 = vmatpush.msra.mxu0 %v1028
    %1040 = vmatpush.msra.mxu0 %v1027
    %1041 = vmatpush.msra.mxu0 %v1026
    %1042 = vmatpush.msra.mxu0 %v1025
    %1043 = vmatpush.msra.mxu0 %v1024
    %1044 = vmatpush.msra.mxu0 %v1023
    %1045 = vmatpush.msra.mxu0 %v1022
    %1046 = vmatpush.msra.mxu0 %v1021
    %1047 = vmatpush.msra.mxu0 %v1020
    %1048 = vmatpush.msra.mxu0 %v1019
    %1049 = vmatpush.msra.mxu0 %v1018
    %1050 = vmatmul.f32.gmra.mxu0 %v937
    %v1051 = vpop.f32.mrf.mxu0
    %v1052 = vadd.f32 0.0, %v1051
    %1053 = vdwg.mxu0
    %v1054 = vadd.f32 %v1016, %v1052
    %v1055 = vtanh.pop %v1054
    %1056 = vst [vmem:[#allocation3 + $0xc] sm:$0x3] %v1055
    %v1057 = vld [vmem:[#allocation8] sm:$0xff]
    %v1058 = vld [vmem:[#allocation8 + $0x8] sm:$0xff]
    %v1059 = vld [vmem:[#allocation8 + $0x10] sm:$0xff]
    %v1060 = vld [vmem:[#allocation8 + $0x18] sm:$0xff]
    %v1061 = vld [vmem:[#allocation8 + $0x20] sm:$0xff]
    %v1062 = vld [vmem:[#allocation8 + $0x28] sm:$0xff]
    %v1063 = vld [vmem:[#allocation8 + $0x30] sm:$0xff]
    %v1064 = vld [vmem:[#allocation8 + $0x38] sm:$0xff]
    %v1065 = vld [vmem:[#allocation8 + $0x40] sm:$0xff]
    %v1066 = vld [vmem:[#allocation8 + $0x48] sm:$0xff]
    %v1067 = vld [vmem:[#allocation8 + $0x50] sm:$0xff]
    %v1068 = vld [vmem:[#allocation8 + $0x58] sm:$0xff]
    %v1069 = vld [vmem:[#allocation8 + $0x60] sm:$0xff]
    %v1070 = vld [vmem:[#allocation8 + $0x68] sm:$0xff]
    %v1071 = vld [vmem:[#allocation8 + $0x70] sm:$0xff]
    %v1072 = vld [vmem:[#allocation8 + $0x78] sm:$0xff]
    %v1073 = vld [vmem:[%s7] sm:$0x1]
    %v1075 = vperm.slane %v1073, 0
    %1077 = vmatpush.msra.mxu0 %v1072
    %1078 = vmatpush.msra.mxu0 %v1071
    %1079 = vmatpush.msra.mxu0 %v1070
    %1080 = vmatpush.msra.mxu0 %v1069
    %1081 = vmatpush.msra.mxu0 %v1068
    %1082 = vmatpush.msra.mxu0 %v1067
    %1083 = vmatpush.msra.mxu0 %v1066
    %1084 = vmatpush.msra.mxu0 %v1065
    %1085 = vmatpush.msra.mxu0 %v1064
    %1086 = vmatpush.msra.mxu0 %v1063
    %1087 = vmatpush.msra.mxu0 %v1062
    %1088 = vmatpush.msra.mxu0 %v1061
    %1089 = vmatpush.msra.mxu0 %v1060
    %1090 = vmatpush.msra.mxu0 %v1059
    %1091 = vmatpush.msra.mxu0 %v1058
    %1092 = vmatpush.msra.mxu0 %v1057
    %1093 = vmatmul.f32.gmra.mxu0 %v977
    %v1094 = vpop.f32.mrf.mxu0
    %v1095 = vadd.f32 %v1075, %v1094
    %1096 = vdwg.mxu0
    %v1097 = vld [vmem:[#allocation9] sm:$0xff]
    %v1098 = vld [vmem:[#allocation9 + $0x8] sm:$0xff]
    %v1099 = vld [vmem:[#allocation9 + $0x10] sm:$0xff]
    %v1100 = vld [vmem:[#allocation9 + $0x18] sm:$0xff]
    %v1101 = vld [vmem:[#allocation9 + $0x20] sm:$0xff]
    %v1102 = vld [vmem:[#allocation9 + $0x28] sm:$0xff]
    %v1103 = vld [vmem:[#allocation9 + $0x30] sm:$0xff]
    %v1104 = vld [vmem:[#allocation9 + $0x38] sm:$0xff]
    %v1105 = vld [vmem:[#allocation9 + $0x40] sm:$0xff]
    %v1106 = vld [vmem:[#allocation9 + $0x48] sm:$0xff]
    %v1107 = vld [vmem:[#allocation9 + $0x50] sm:$0xff]
    %v1108 = vld [vmem:[#allocation9 + $0x58] sm:$0xff]
    %v1109 = vld [vmem:[#allocation9 + $0x60] sm:$0xff]
    %v1110 = vld [vmem:[#allocation9 + $0x68] sm:$0xff]
    %v1111 = vld [vmem:[#allocation9 + $0x70] sm:$0xff]
    %v1112 = vld [vmem:[#allocation9 + $0x78] sm:$0xff]
    %1113 = vmatpush.msra.mxu0 %v1112
    %1114 = vmatpush.msra.mxu0 %v1111
    %1115 = vmatpush.msra.mxu0 %v1110
    %1116 = vmatpush.msra.mxu0 %v1109
    %1117 = vmatpush.msra.mxu0 %v1108
    %1118 = vmatpush.msra.mxu0 %v1107
    %1119 = vmatpush.msra.mxu0 %v1106
    %1120 = vmatpush.msra.mxu0 %v1105
    %1121 = vmatpush.msra.mxu0 %v1104
    %1122 = vmatpush.msra.mxu0 %v1103
    %1123 = vmatpush.msra.mxu0 %v1102
    %1124 = vmatpush.msra.mxu0 %v1101
    %1125 = vmatpush.msra.mxu0 %v1100
    %1126 = vmatpush.msra.mxu0 %v1099
    %1127 = vmatpush.msra.mxu0 %v1098
    %1128 = vmatpush.msra.mxu0 %v1097
    %1129 = vmatmul.f32.gmra.mxu0 %v1055
    %v1130 = vpop.f32.mrf.mxu0
    %v1131 = vadd.f32 0.0, %v1130
    %1132 = vdwg.mxu0
    %v1133 = vadd.f32 %v1095, %v1131
    %v1134 = vtanh.pop %v1133
    %1135 = vst [vmem:[#allocation3 + $0xe] sm:$0x3] %v1134
    %v1136 = vld [vmem:[#allocation3] sm:$0xff]
    %v1137 = vld [vmem:[#allocation3 + $0x8] sm:$0xff]
    %v1138 = vld [vmem:[#allocation11] sm:$0xff]
    %v1139 = vld [vmem:[#allocation11 + $0x8] sm:$0xff]
    %v1140 = vld [vmem:[#allocation11 + $0x10] sm:$0xff]
    %v1141 = vld [vmem:[#allocation11 + $0x18] sm:$0xff]
    %v1142 = vld [vmem:[#allocation11 + $0x20] sm:$0xff]
    %v1143 = vld [vmem:[#allocation11 + $0x28] sm:$0xff]
    %v1144 = vld [vmem:[#allocation11 + $0x30] sm:$0xff]
    %v1145 = vld [vmem:[#allocation11 + $0x38] sm:$0xff]
    %v1146 = vld [vmem:[#allocation11 + $0x40] sm:$0xff]
    %v1147 = vld [vmem:[#allocation11 + $0x48] sm:$0xff]
    %v1148 = vld [vmem:[#allocation11 + $0x50] sm:$0xff]
    %v1149 = vld [vmem:[#allocation11 + $0x58] sm:$0xff]
    %v1150 = vld [vmem:[#allocation11 + $0x60] sm:$0xff]
    %v1151 = vld [vmem:[#allocation11 + $0x68] sm:$0xff]
    %v1152 = vld [vmem:[#allocation11 + $0x70] sm:$0xff]
    %v1153 = vld [vmem:[#allocation11 + $0x78] sm:$0xff]
    %v1154 = vld [vmem:[%s9] sm:$0x1]
    %v1156 = vperm.slane %v1154, 0
    %1158 = vmatpush.msra.mxu0 %v1153
    %1159 = vmatpush.msra.mxu0 %v1152
    %1160 = vmatpush.msra.mxu0 %v1151
    %1161 = vmatpush.msra.mxu0 %v1150
    %1162 = vmatpush.msra.mxu0 %v1149
    %1163 = vmatpush.msra.mxu0 %v1148
    %1164 = vmatpush.msra.mxu0 %v1147
    %1165 = vmatpush.msra.mxu0 %v1146
    %1166 = vmatpush.msra.mxu0 %v1145
    %1167 = vmatpush.msra.mxu0 %v1144
    %1168 = vmatpush.msra.mxu0 %v1143
    %1169 = vmatpush.msra.mxu0 %v1142
    %1170 = vmatpush.msra.mxu0 %v1141
    %1171 = vmatpush.msra.mxu0 %v1140
    %1172 = vmatpush.msra.mxu0 %v1139
    %1173 = vmatpush.msra.mxu0 %v1138
    %1174 = vmatmul.f32.gmra.mxu0 %v1136
    %v1175 = vpop.f32.mrf.mxu0
    %v1176 = vadd.f32 %v1156, %v1175
    %1177 = vmatmul.f32.gmra.mxu0 %v1137
    %v1178 = vpop.f32.mrf.mxu0
    %v1179 = vadd.f32 %v1156, %v1178
    %1180 = vdwg.mxu0
    %1181 = vst [vmem:[%s10] sm:$0xff] %v1176
    %1182 = vst [vmem:[%s10 + $0x8] sm:$0xff] %v1179
    // Predicated region
    $region62: #{torch_model_forward.1} parent=1 // pred_check
      _
    $region63: #{torch_model_forward.1} parent=1 // pred_check_branch
      %1184 = sbr.rel (0) target = $region65
    $region64: #{torch_model_forward.1} parent=1 // pred_region
      _
    $region65: #{torch_model_forward.1} parent=1 // pred_fallthru
      _
    // Predicated region
    $region66: #{torch_model_forward.1} parent=1 // pred_check
      _
    $region67: #{torch_model_forward.1} parent=1 // pred_check_branch
      %1186 = sbr.rel (0) target = $region69
    $region68: #{torch_model_forward.1} parent=1 // pred_region
      _
    $region69: #{torch_model_forward.1} parent=1 // pred_fallthru
      _
    %1187 = vsyncpa [#allocation5], 1
    %1188 = vsyncpa [#allocation7], 1
    %1189 = vsyncpa [#allocation10], 1

</llo_original>
